<compile_context>
chip_gen: v7x
topology: tpu7x:2x2x1
jax: 0.10.0
libtpu: 0.0.40
codegen_flags: <defaults>
</compile_context>

<pallas_src>
import jax
import jax.numpy as jnp
from jax import lax
from jax.experimental import pallas as pl
from jax.experimental.pallas import tpu as pltpu

SELU_ALPHA = 1.6732632423543772
SELU_SCALE = 1.0507009873554805

K_IN = 784          # input features (streamed unpadded)
F_PAD = 128         # hidden / logits feature dims padded to one lane tile
N_CLASSES = 10
N_OUT_PAD = 16      # lanes actually written back to HBM
MAX_TM = 1024       # batch tile (rows per grid step) for large batches


def _selu(v):
    return SELU_SCALE * jnp.where(v > 0, v, SELU_ALPHA * (jnp.exp(v) - 1.0))


def _round_up(n, m):
    return ((n + m - 1) // m) * m


def mlp_kernel(x_ref, w0_ref, b0_ref, w2_ref, w4_ref, b4_ref,
               w6_ref, b6_ref, w8_ref, w10_ref, b10_ref, out_ref):
    # bf16 operands + f32 accumulation -> single-pass MXU on all generations.
    x = x_ref[...].astype(jnp.bfloat16)
    h = _selu(jnp.dot(x, w0_ref[...],
                      preferred_element_type=jnp.float32) + b0_ref[...])
    h = _selu(jnp.dot(h.astype(jnp.bfloat16), w2_ref[...],
                      preferred_element_type=jnp.float32))
    h = _selu(jnp.dot(h.astype(jnp.bfloat16), w4_ref[...],
                      preferred_element_type=jnp.float32) + b4_ref[...])
    h = _selu(jnp.dot(h.astype(jnp.bfloat16), w6_ref[...],
                      preferred_element_type=jnp.float32) + b6_ref[...])
    h = _selu(jnp.dot(h.astype(jnp.bfloat16), w8_ref[...],
                      preferred_element_type=jnp.float32))
    logits = jnp.dot(h.astype(jnp.bfloat16), w10_ref[...],
                     preferred_element_type=jnp.float32) + b10_ref[...]

    # Only the first N_CLASSES lanes are real classes; exclude padded lanes
    # from the log-softmax reduction by masking them to -inf.
    lane = lax.broadcasted_iota(jnp.int32, logits.shape, 1)
    logits = jnp.where(lane < N_CLASSES, logits, -jnp.inf)
    m = jnp.max(logits, axis=1, keepdims=True)
    z = logits - m
    lse = jnp.log(jnp.sum(jnp.exp(z), axis=1, keepdims=True))
    # Narrow (16-lane) writeback: only real classes (+6 pad lanes) hit HBM.
    out_ref[...] = (z - lse)[:, :N_OUT_PAD]


def _pad2(a, rows, cols):
    return jnp.pad(a, ((0, rows - a.shape[0]), (0, cols - a.shape[1])))


def _prep_params(params):
    """Zero-pad weights to lane-dense shapes (pads are exactly 0); weights bf16."""
    bf = jnp.bfloat16
    p = {}
    p["w0"] = _pad2(params["w0"], K_IN, F_PAD).astype(bf)     # (784,99) -> (784,128)
    p["b0"] = _pad2(params["b0"], 1, F_PAD).astype(jnp.float32)
    p["w2"] = _pad2(params["w2"], F_PAD, F_PAD).astype(bf)    # (99,75)  -> (128,128)
    p["w4"] = _pad2(params["w4"], F_PAD, F_PAD).astype(bf)    # (75,58)  -> (128,128)
    p["b4"] = _pad2(params["b4"], 1, F_PAD).astype(jnp.float32)
    p["w6"] = _pad2(params["w6"], F_PAD, F_PAD).astype(bf)    # (58,34)  -> (128,128)
    p["b6"] = _pad2(params["b6"], 1, F_PAD).astype(jnp.float32)
    p["w8"] = _pad2(params["w8"], F_PAD, F_PAD).astype(bf)    # (34,26)  -> (128,128)
    p["w10"] = _pad2(params["w10"], F_PAD, F_PAD).astype(bf)  # (26,10)  -> (128,128)
    p["b10"] = _pad2(params["b10"], 1, F_PAD).astype(jnp.float32)
    return p


def linearselu_21_forward(x, params, max_tile=MAX_TM):
    B = x.shape[0]
    x2d = x.reshape(B, K_IN).astype(jnp.float32)

    # Batch tile: sublane-aligned (multiple of 8).  Pad rows only if needed.
    tm = min(max_tile, _round_up(B, 8))
    n_tiles = pl.cdiv(B, tm)
    Bp = n_tiles * tm
    if Bp != B:
        x2d = jnp.pad(x2d, ((0, Bp - B), (0, 0)))

    pk = _prep_params(params)
    args = (x2d,
            pk["w0"], pk["b0"], pk["w2"], pk["w4"], pk["b4"],
            pk["w6"], pk["b6"], pk["w8"], pk["w10"], pk["b10"])

    # x/out tiled over batch; weights/biases use constant index_maps so Pallas
    # keeps them resident in VMEM across all grid steps.
    const2 = lambda i: (0, 0)
    in_specs = [
        pl.BlockSpec((tm, K_IN), lambda i: (i, 0)),      # x tile (unpadded K)
        pl.BlockSpec((K_IN, F_PAD), const2),             # w0 (bf16)
        pl.BlockSpec((1, F_PAD), const2),                # b0
        pl.BlockSpec((F_PAD, F_PAD), const2),            # w2
        pl.BlockSpec((F_PAD, F_PAD), const2),            # w4
        pl.BlockSpec((1, F_PAD), const2),                # b4
        pl.BlockSpec((F_PAD, F_PAD), const2),            # w6
        pl.BlockSpec((1, F_PAD), const2),                # b6
        pl.BlockSpec((F_PAD, F_PAD), const2),            # w8
        pl.BlockSpec((F_PAD, F_PAD), const2),            # w10
        pl.BlockSpec((1, F_PAD), const2),                # b10
    ]
    out_spec = pl.BlockSpec((tm, N_OUT_PAD), lambda i: (i, 0))

    flops = 2 * Bp * (K_IN * F_PAD + 5 * F_PAD * F_PAD)
    bytes_accessed = (4 * Bp * K_IN + 4 * Bp * N_OUT_PAD
                      + 2 * (K_IN * F_PAD + 5 * F_PAD * F_PAD)
                      + 4 * 4 * F_PAD)
    transcendentals = Bp * 6 * F_PAD  # 5x SELU exp + softmax exp/log

    out_padded = pl.pallas_call(
        mlp_kernel,
        out_shape=jax.ShapeDtypeStruct((Bp, N_OUT_PAD), jnp.float32),
        grid=(n_tiles,),
        in_specs=in_specs,
        out_specs=out_spec,
        compiler_params=pltpu.CompilerParams(
            dimension_semantics=("parallel",)),
        cost_estimate=pl.CostEstimate(
            flops=flops,
            transcendentals=transcendentals,
            bytes_accessed=bytes_accessed),
    )(*args)

    return out_padded[:B, :N_CLASSES]


def init_params(key):
    # Deterministic PyTorch-style init: U(-1/sqrt(fan_in), 1/sqrt(fan_in)).
    # Weights stored already transposed: (in_features, out_features).
    dims = [(784, 99, True), (99, 75, False), (75, 58, True),
            (58, 34, True), (34, 26, False), (26, 10, True)]
    names = ["0", "2", "4", "6", "8", "10"]
    params = {}
    for (fan_in, fan_out, has_bias), name in zip(dims, names):
        key, kw, kb = jax.random.split(key, 3)
        bound = 1.0 / (fan_in ** 0.5)
        params["w" + name] = jax.random.uniform(
            kw, (fan_in, fan_out), jnp.float32, -bound, bound)
        if has_bias:
            params["b" + name] = jax.random.uniform(
                kb, (1, fan_out), jnp.float32, -bound, bound)
    return params


def reference_forward(x, params):
    B = x.shape[0]
    h = x.reshape(B, K_IN).astype(jnp.float32)
    h = _selu(h @ params["w0"] + params["b0"])
    h = _selu(h @ params["w2"])
    h = _selu(h @ params["w4"] + params["b4"])
    h = _selu(h @ params["w6"] + params["b6"])
    h = _selu(h @ params["w8"])
    logits = h @ params["w10"] + params["b10"]
    return jax.nn.log_softmax(logits, axis=1)


if __name__ == "__main__":
    key = jax.random.PRNGKey(0)
    key, kx = jax.random.split(key)
    x = jax.random.normal(kx, (2, 1, 28, 28), jnp.float32)
    params = init_params(key)

    out = linearselu_21_forward(x, params)
    out = jax.block_until_ready(out)

    ref = reference_forward(x, params)
    assert out.shape == (2, 10)
    assert bool(jnp.all(jnp.isfinite(out)))
    # bf16 single-pass MXU inside the kernel -> loosened tolerance vs f32 reference.
    assert jnp.allclose(out, ref, atol=5e-2, rtol=5e-2)
    print("KERNEL_OK")
</pallas_src>

<mosaic_0001>
module attributes {stable_mosaic.version = 11 : i64} {
  func.func @mlp_kernel(%arg0: i32, %arg1: memref<8x784xf32, #tpu.memory_space<vmem>>, %arg2: memref<784x128xbf16, #tpu.memory_space<vmem>>, %arg3: memref<1x128xf32, #tpu.memory_space<vmem>>, %arg4: memref<128x128xbf16, #tpu.memory_space<vmem>>, %arg5: memref<128x128xbf16, #tpu.memory_space<vmem>>, %arg6: memref<1x128xf32, #tpu.memory_space<vmem>>, %arg7: memref<128x128xbf16, #tpu.memory_space<vmem>>, %arg8: memref<1x128xf32, #tpu.memory_space<vmem>>, %arg9: memref<128x128xbf16, #tpu.memory_space<vmem>>, %arg10: memref<128x128xbf16, #tpu.memory_space<vmem>>, %arg11: memref<1x128xf32, #tpu.memory_space<vmem>>, %arg12: memref<8x16xf32, #tpu.memory_space<vmem>>) attributes {dimension_semantics = [#tpu.dimension_semantics<parallel>], iteration_bounds = array<i64: 1>, scalar_prefetch = 0 : i64, scratch_operands = 0 : i64, tpu.core_type = #tpu.core_type<tc>, window_params = [{transform_indices = @transform_0, window_bounds = array<i64: 8, 784>}, {pipeline_mode = #tpu.pipeline_mode<synchronous>, transform_indices = @transform_1, window_bounds = array<i64: 784, 128>}, {pipeline_mode = #tpu.pipeline_mode<synchronous>, transform_indices = @transform_2, window_bounds = array<i64: 1, 128>}, {pipeline_mode = #tpu.pipeline_mode<synchronous>, transform_indices = @transform_3, window_bounds = array<i64: 128, 128>}, {pipeline_mode = #tpu.pipeline_mode<synchronous>, transform_indices = @transform_4, window_bounds = array<i64: 128, 128>}, {pipeline_mode = #tpu.pipeline_mode<synchronous>, transform_indices = @transform_5, window_bounds = array<i64: 1, 128>}, {pipeline_mode = #tpu.pipeline_mode<synchronous>, transform_indices = @transform_6, window_bounds = array<i64: 128, 128>}, {pipeline_mode = #tpu.pipeline_mode<synchronous>, transform_indices = @transform_7, window_bounds = array<i64: 1, 128>}, {pipeline_mode = #tpu.pipeline_mode<synchronous>, transform_indices = @transform_8, window_bounds = array<i64: 128, 128>}, {pipeline_mode = #tpu.pipeline_mode<synchronous>, transform_indices = @transform_9, window_bounds = array<i64: 128, 128>}, {pipeline_mode = #tpu.pipeline_mode<synchronous>, transform_indices = @transform_10, window_bounds = array<i64: 1, 128>}, {transform_indices = @transform_11, window_bounds = array<i64: 8, 16>}]} {
    %c0 = arith.constant 0 : index
    %c0_0 = arith.constant 0 : index
    %0 = vector.load %arg1[%c0, %c0_0] : memref<8x784xf32, #tpu.memory_space<vmem>>, vector<8x784xf32>
    %1 = arith.truncf %0 : vector<8x784xf32> to vector<8x784xbf16>
    %c0_1 = arith.constant 0 : index
    %c0_2 = arith.constant 0 : index
    %2 = vector.load %arg2[%c0_1, %c0_2] : memref<784x128xbf16, #tpu.memory_space<vmem>>, vector<784x128xbf16>
    %cst = arith.constant dense<0.000000e+00> : vector<8x128xf32>
    %3 = tpu.matmul %1, %2, %cst {dimension_numbers = #tpu.dot_dimension_numbers<[1], [0], [0], [1], [0, 0, 1, 1], [], []>} : vector<8x784xbf16>, vector<784x128xbf16>, vector<8x128xf32> -> vector<8x128xf32>
    %c0_3 = arith.constant 0 : index
    %c0_4 = arith.constant 0 : index
    %4 = vector.load %arg3[%c0_3, %c0_4] : memref<1x128xf32, #tpu.memory_space<vmem>>, vector<1x128xf32>
    %5 = vector.broadcast %4 : vector<1x128xf32> to vector<8x128xf32>
    %6 = arith.addf %3, %5 : vector<8x128xf32>
    %cst_5 = arith.constant 0.000000e+00 : f32
    %7 = vector.broadcast %cst_5 : f32 to vector<8x128xf32>
    %8 = arith.cmpf ogt, %6, %7 : vector<8x128xf32>
    %9 = math.exp %6 : vector<8x128xf32>
    %cst_6 = arith.constant 1.000000e+00 : f32
    %10 = vector.broadcast %cst_6 : f32 to vector<8x128xf32>
    %11 = arith.subf %9, %10 : vector<8x128xf32>
    %cst_7 = arith.constant 1.67326319 : f32
    %12 = vector.broadcast %cst_7 : f32 to vector<8x128xf32>
    %13 = arith.mulf %12, %11 : vector<8x128xf32>
    %14 = arith.select %8, %6, %13 : vector<8x128xi1>, vector<8x128xf32>
    %cst_8 = arith.constant 1.05070102 : f32
    %15 = vector.broadcast %cst_8 : f32 to vector<8x128xf32>
    %16 = arith.mulf %15, %14 : vector<8x128xf32>
    %17 = arith.truncf %16 : vector<8x128xf32> to vector<8x128xbf16>
    %c0_9 = arith.constant 0 : index
    %c0_10 = arith.constant 0 : index
    %18 = vector.load %arg4[%c0_9, %c0_10] : memref<128x128xbf16, #tpu.memory_space<vmem>>, vector<128x128xbf16>
    %cst_11 = arith.constant dense<0.000000e+00> : vector<8x128xf32>
    %19 = tpu.matmul %17, %18, %cst_11 {dimension_numbers = #tpu.dot_dimension_numbers<[1], [0], [0], [1], [0, 0, 1, 1], [], []>} : vector<8x128xbf16>, vector<128x128xbf16>, vector<8x128xf32> -> vector<8x128xf32>
    %cst_12 = arith.constant 0.000000e+00 : f32
    %20 = vector.broadcast %cst_12 : f32 to vector<8x128xf32>
    %21 = arith.cmpf ogt, %19, %20 : vector<8x128xf32>
    %22 = math.exp %19 : vector<8x128xf32>
    %cst_13 = arith.constant 1.000000e+00 : f32
    %23 = vector.broadcast %cst_13 : f32 to vector<8x128xf32>
    %24 = arith.subf %22, %23 : vector<8x128xf32>
    %cst_14 = arith.constant 1.67326319 : f32
    %25 = vector.broadcast %cst_14 : f32 to vector<8x128xf32>
    %26 = arith.mulf %25, %24 : vector<8x128xf32>
    %27 = arith.select %21, %19, %26 : vector<8x128xi1>, vector<8x128xf32>
    %cst_15 = arith.constant 1.05070102 : f32
    %28 = vector.broadcast %cst_15 : f32 to vector<8x128xf32>
    %29 = arith.mulf %28, %27 : vector<8x128xf32>
    %30 = arith.truncf %29 : vector<8x128xf32> to vector<8x128xbf16>
    %c0_16 = arith.constant 0 : index
    %c0_17 = arith.constant 0 : index
    %31 = vector.load %arg5[%c0_16, %c0_17] : memref<128x128xbf16, #tpu.memory_space<vmem>>, vector<128x128xbf16>
    %cst_18 = arith.constant dense<0.000000e+00> : vector<8x128xf32>
    %32 = tpu.matmul %30, %31, %cst_18 {dimension_numbers = #tpu.dot_dimension_numbers<[1], [0], [0], [1], [0, 0, 1, 1], [], []>} : vector<8x128xbf16>, vector<128x128xbf16>, vector<8x128xf32> -> vector<8x128xf32>
    %c0_19 = arith.constant 0 : index
    %c0_20 = arith.constant 0 : index
    %33 = vector.load %arg6[%c0_19, %c0_20] : memref<1x128xf32, #tpu.memory_space<vmem>>, vector<1x128xf32>
    %34 = vector.broadcast %33 : vector<1x128xf32> to vector<8x128xf32>
    %35 = arith.addf %32, %34 : vector<8x128xf32>
    %cst_21 = arith.constant 0.000000e+00 : f32
    %36 = vector.broadcast %cst_21 : f32 to vector<8x128xf32>
    %37 = arith.cmpf ogt, %35, %36 : vector<8x128xf32>
    %38 = math.exp %35 : vector<8x128xf32>
    %cst_22 = arith.constant 1.000000e+00 : f32
    %39 = vector.broadcast %cst_22 : f32 to vector<8x128xf32>
    %40 = arith.subf %38, %39 : vector<8x128xf32>
    %cst_23 = arith.constant 1.67326319 : f32
    %41 = vector.broadcast %cst_23 : f32 to vector<8x128xf32>
    %42 = arith.mulf %41, %40 : vector<8x128xf32>
    %43 = arith.select %37, %35, %42 : vector<8x128xi1>, vector<8x128xf32>
    %cst_24 = arith.constant 1.05070102 : f32
    %44 = vector.broadcast %cst_24 : f32 to vector<8x128xf32>
    %45 = arith.mulf %44, %43 : vector<8x128xf32>
    %46 = arith.truncf %45 : vector<8x128xf32> to vector<8x128xbf16>
    %c0_25 = arith.constant 0 : index
    %c0_26 = arith.constant 0 : index
    %47 = vector.load %arg7[%c0_25, %c0_26] : memref<128x128xbf16, #tpu.memory_space<vmem>>, vector<128x128xbf16>
    %cst_27 = arith.constant dense<0.000000e+00> : vector<8x128xf32>
    %48 = tpu.matmul %46, %47, %cst_27 {dimension_numbers = #tpu.dot_dimension_numbers<[1], [0], [0], [1], [0, 0, 1, 1], [], []>} : vector<8x128xbf16>, vector<128x128xbf16>, vector<8x128xf32> -> vector<8x128xf32>
    %c0_28 = arith.constant 0 : index
    %c0_29 = arith.constant 0 : index
    %49 = vector.load %arg8[%c0_28, %c0_29] : memref<1x128xf32, #tpu.memory_space<vmem>>, vector<1x128xf32>
    %50 = vector.broadcast %49 : vector<1x128xf32> to vector<8x128xf32>
    %51 = arith.addf %48, %50 : vector<8x128xf32>
    %cst_30 = arith.constant 0.000000e+00 : f32
    %52 = vector.broadcast %cst_30 : f32 to vector<8x128xf32>
    %53 = arith.cmpf ogt, %51, %52 : vector<8x128xf32>
    %54 = math.exp %51 : vector<8x128xf32>
    %cst_31 = arith.constant 1.000000e+00 : f32
    %55 = vector.broadcast %cst_31 : f32 to vector<8x128xf32>
    %56 = arith.subf %54, %55 : vector<8x128xf32>
    %cst_32 = arith.constant 1.67326319 : f32
    %57 = vector.broadcast %cst_32 : f32 to vector<8x128xf32>
    %58 = arith.mulf %57, %56 : vector<8x128xf32>
    %59 = arith.select %53, %51, %58 : vector<8x128xi1>, vector<8x128xf32>
    %cst_33 = arith.constant 1.05070102 : f32
    %60 = vector.broadcast %cst_33 : f32 to vector<8x128xf32>
    %61 = arith.mulf %60, %59 : vector<8x128xf32>
    %62 = arith.truncf %61 : vector<8x128xf32> to vector<8x128xbf16>
    %c0_34 = arith.constant 0 : index
    %c0_35 = arith.constant 0 : index
    %63 = vector.load %arg9[%c0_34, %c0_35] : memref<128x128xbf16, #tpu.memory_space<vmem>>, vector<128x128xbf16>
    %cst_36 = arith.constant dense<0.000000e+00> : vector<8x128xf32>
    %64 = tpu.matmul %62, %63, %cst_36 {dimension_numbers = #tpu.dot_dimension_numbers<[1], [0], [0], [1], [0, 0, 1, 1], [], []>} : vector<8x128xbf16>, vector<128x128xbf16>, vector<8x128xf32> -> vector<8x128xf32>
    %cst_37 = arith.constant 0.000000e+00 : f32
    %65 = vector.broadcast %cst_37 : f32 to vector<8x128xf32>
    %66 = arith.cmpf ogt, %64, %65 : vector<8x128xf32>
    %67 = math.exp %64 : vector<8x128xf32>
    %cst_38 = arith.constant 1.000000e+00 : f32
    %68 = vector.broadcast %cst_38 : f32 to vector<8x128xf32>
    %69 = arith.subf %67, %68 : vector<8x128xf32>
    %cst_39 = arith.constant 1.67326319 : f32
    %70 = vector.broadcast %cst_39 : f32 to vector<8x128xf32>
    %71 = arith.mulf %70, %69 : vector<8x128xf32>
    %72 = arith.select %66, %64, %71 : vector<8x128xi1>, vector<8x128xf32>
    %cst_40 = arith.constant 1.05070102 : f32
    %73 = vector.broadcast %cst_40 : f32 to vector<8x128xf32>
    %74 = arith.mulf %73, %72 : vector<8x128xf32>
    %75 = arith.truncf %74 : vector<8x128xf32> to vector<8x128xbf16>
    %c0_41 = arith.constant 0 : index
    %c0_42 = arith.constant 0 : index
    %76 = vector.load %arg10[%c0_41, %c0_42] : memref<128x128xbf16, #tpu.memory_space<vmem>>, vector<128x128xbf16>
    %cst_43 = arith.constant dense<0.000000e+00> : vector<8x128xf32>
    %77 = tpu.matmul %75, %76, %cst_43 {dimension_numbers = #tpu.dot_dimension_numbers<[1], [0], [0], [1], [0, 0, 1, 1], [], []>} : vector<8x128xbf16>, vector<128x128xbf16>, vector<8x128xf32> -> vector<8x128xf32>
    %c0_44 = arith.constant 0 : index
    %c0_45 = arith.constant 0 : index
    %78 = vector.load %arg11[%c0_44, %c0_45] : memref<1x128xf32, #tpu.memory_space<vmem>>, vector<1x128xf32>
    %79 = vector.broadcast %78 : vector<1x128xf32> to vector<8x128xf32>
    %80 = arith.addf %77, %79 : vector<8x128xf32>
    %81 = tpu.iota {dimensions = array<i32: 1>} : vector<8x128xi32>
    %c10_i32 = arith.constant 10 : i32
    %82 = vector.broadcast %c10_i32 : i32 to vector<8x128xi32>
    %83 = arith.cmpi slt, %81, %82 : vector<8x128xi32>
    %cst_46 = arith.constant 0xFF800000 : f32
    %84 = vector.broadcast %cst_46 : f32 to vector<8x128xf32>
    %85 = arith.select %83, %80, %84 : vector<8x128xi1>, vector<8x128xf32>
    %cst_47 = arith.constant dense<0xFF800000> : vector<8xf32>
    %86 = vector.multi_reduction <maximumf>, %85, %cst_47 [1] : vector<8x128xf32> to vector<8xf32>
    %87 = vector.shape_cast %86 : vector<8xf32> to vector<8x1xf32>
    %88 = vector.broadcast %87 : vector<8x1xf32> to vector<8x128xf32>
    %89 = arith.subf %85, %88 : vector<8x128xf32>
    %90 = math.exp %89 : vector<8x128xf32>
    %cst_48 = arith.constant dense<0.000000e+00> : vector<8xf32>
    %91 = vector.multi_reduction <add>, %90, %cst_48 [1] : vector<8x128xf32> to vector<8xf32>
    %92 = vector.shape_cast %91 : vector<8xf32> to vector<8x1xf32>
    %93 = math.log %92 : vector<8x1xf32>
    %94 = vector.broadcast %93 : vector<8x1xf32> to vector<8x128xf32>
    %95 = arith.subf %89, %94 : vector<8x128xf32>
    %96 = vector.extract_strided_slice %95 {offsets = [0, 0], sizes = [8, 16], strides = [1, 1]} : vector<8x128xf32> to vector<8x16xf32>
    %c0_49 = arith.constant 0 : index
    %c0_50 = arith.constant 0 : index
    %97 = vector.load %arg12[%c0_49, %c0_50] : memref<8x16xf32, #tpu.memory_space<vmem>>, vector<8x16xf32>
    tpu.vector_store %arg12[%c0_49, %c0_50], %96 {strides = array<i32>} : memref<8x16xf32, #tpu.memory_space<vmem>>, vector<8x16xf32>,
    return
  }
  func.func @transform_0(%arg0: i32) -> (i32, i32) {
    %c0_i32 = arith.constant 0 : i32
    %c0_i32_0 = arith.constant 0 : i32
    return %arg0, %c0_i32 : i32, i32
  }
  func.func @transform_1(%arg0: i32) -> (i32, i32) {
    %c0_i32 = arith.constant 0 : i32
    %c0_i32_0 = arith.constant 0 : i32
    %c0_i32_1 = arith.constant 0 : i32
    return %c0_i32, %c0_i32_0 : i32, i32
  }
  func.func @transform_2(%arg0: i32) -> (i32, i32) {
    %c0_i32 = arith.constant 0 : i32
    %c0_i32_0 = arith.constant 0 : i32
    %c0_i32_1 = arith.constant 0 : i32
    return %c0_i32, %c0_i32_0 : i32, i32
  }
  func.func @transform_3(%arg0: i32) -> (i32, i32) {
    %c0_i32 = arith.constant 0 : i32
    %c0_i32_0 = arith.constant 0 : i32
    %c0_i32_1 = arith.constant 0 : i32
    return %c0_i32, %c0_i32_0 : i32, i32
  }
  func.func @transform_4(%arg0: i32) -> (i32, i32) {
    %c0_i32 = arith.constant 0 : i32
    %c0_i32_0 = arith.constant 0 : i32
    %c0_i32_1 = arith.constant 0 : i32
    return %c0_i32, %c0_i32_0 : i32, i32
  }
  func.func @transform_5(%arg0: i32) -> (i32, i32) {
    %c0_i32 = arith.constant 0 : i32
    %c0_i32_0 = arith.constant 0 : i32
    %c0_i32_1 = arith.constant 0 : i32
    return %c0_i32, %c0_i32_0 : i32, i32
  }
  func.func @transform_6(%arg0: i32) -> (i32, i32) {
    %c0_i32 = arith.constant 0 : i32
    %c0_i32_0 = arith.constant 0 : i32
    %c0_i32_1 = arith.constant 0 : i32
    return %c0_i32, %c0_i32_0 : i32, i32
  }
  func.func @transform_7(%arg0: i32) -> (i32, i32) {
    %c0_i32 = arith.constant 0 : i32
    %c0_i32_0 = arith.constant 0 : i32
    %c0_i32_1 = arith.constant 0 : i32
    return %c0_i32, %c0_i32_0 : i32, i32
  }
  func.func @transform_8(%arg0: i32) -> (i32, i32) {
    %c0_i32 = arith.constant 0 : i32
    %c0_i32_0 = arith.constant 0 : i32
    %c0_i32_1 = arith.constant 0 : i32
    return %c0_i32, %c0_i32_0 : i32, i32
  }
  func.func @transform_9(%arg0: i32) -> (i32, i32) {
    %c0_i32 = arith.constant 0 : i32
    %c0_i32_0 = arith.constant 0 : i32
    %c0_i32_1 = arith.constant 0 : i32
    return %c0_i32, %c0_i32_0 : i32, i32
  }
  func.func @transform_10(%arg0: i32) -> (i32, i32) {
    %c0_i32 = arith.constant 0 : i32
    %c0_i32_0 = arith.constant 0 : i32
    %c0_i32_1 = arith.constant 0 : i32
    return %c0_i32, %c0_i32_0 : i32, i32
  }
  func.func @transform_11(%arg0: i32) -> (i32, i32) {
    %c0_i32 = arith.constant 0 : i32
    %c0_i32_0 = arith.constant 0 : i32
    return %arg0, %c0_i32 : i32, i32
  }
}

</mosaic_0001>

<llo_original>
// kernel: tpu_custom_call.1
$region0: #{tpu_custom_call.1}
  #allocation0 [shape = 'u32[]', space=smem, size = 0x4, offset = 0x4, fixed_abs, tag = 'smem constant byte address 0x4 - core index']
  #allocation1 [shape = 'u32[144,128]{1,0:T(1,128)}', space=vmem, size = 0x12000, scoped, tag = 'internal scratch']
  %s0 = inlined_call_operand.hbm [shape: f32[8,784], index: 0, kind: input, shape index: {}]
  %s1 = inlined_call_operand.hbm [shape: bf16[784,128], index: 1, kind: input, shape index: {}]
  %s2 = inlined_call_operand.vmem [shape: f32[1,128], index: 2, kind: input, shape index: {}]
  %s3 = inlined_call_operand.hbm [shape: bf16[128,128], index: 3, kind: input, shape index: {}]
  %s4 = inlined_call_operand.hbm [shape: bf16[128,128], index: 4, kind: input, shape index: {}]
  %s5 = inlined_call_operand.vmem [shape: f32[1,128], index: 5, kind: input, shape index: {}]
  %s6 = inlined_call_operand.hbm [shape: bf16[128,128], index: 6, kind: input, shape index: {}]
  %s7 = inlined_call_operand.vmem [shape: f32[1,128], index: 7, kind: input, shape index: {}]
  %s8 = inlined_call_operand.hbm [shape: bf16[128,128], index: 8, kind: input, shape index: {}]
  %s9 = inlined_call_operand.hbm [shape: bf16[128,128], index: 9, kind: input, shape index: {}]
  %s10 = inlined_call_operand.vmem [shape: f32[1,128], index: 10, kind: input, shape index: {}]
  %s11 = inlined_call_operand.hbm [shape: f32[8,16], index: 11, kind: output, shape index: {}]
  %s12 = sld [smem:[#allocation0]]
  $region82: #{tpu_custom_call.1} parent=0
    _
  %s14 = ssub.s32 1, %s12
  %s15 = scalar_select 0, %s14, %s12
  $region1: #{tpu_custom_call.1} parent=0
    #allocation2 [shape = 'u8[28672]{0}', space=vmem, size = 0x7000, scoped, tag = 'input window, operand 0, single buffered']
    #allocation3 [shape = 's32[1]{0}', space=sflag, size = 0x4, scoped, tag = 'scoped memory for tpu_custom_call.1']
    #allocation4 [shape = 's32[1]{0}', space=sflag, size = 0x4, scoped, tag = 'scoped memory for tpu_custom_call.1']
    #allocation5 [shape = 'u8[200704]{0}', space=vmem, size = 0x31000, scoped, tag = 'input window, operand 1, single buffered']
    #allocation6 [shape = 's32[1]{0}', space=sflag, size = 0x4, scoped, tag = 'scoped memory for tpu_custom_call.1']
    #allocation7 [shape = 'u8[32768]{0}', space=vmem, size = 0x8000, scoped, tag = 'input window, operand 3, single buffered']
    #allocation8 [shape = 'u8[32768]{0}', space=vmem, size = 0x8000, scoped, tag = 'input window, operand 4, single buffered']
    #allocation9 [shape = 's32[1]{0}', space=sflag, size = 0x4, scoped, tag = 'scoped memory for tpu_custom_call.1']
    #allocation10 [shape = 'u8[32768]{0}', space=vmem, size = 0x8000, scoped, tag = 'input window, operand 6, single buffered']
    #allocation11 [shape = 'u8[32768]{0}', space=vmem, size = 0x8000, scoped, tag = 'input window, operand 8, single buffered']
    #allocation12 [shape = 's32[1]{0}', space=sflag, size = 0x4, scoped, tag = 'scoped memory for tpu_custom_call.1']
    #allocation13 [shape = 'u8[32768]{0}', space=vmem, size = 0x8000, scoped, tag = 'input window, operand 9, single buffered']
    #allocation14 [shape = 'u8[4096]{0}', space=vmem, size = 0x1000, scoped, tag = 'output window, operand 0, single buffered']
    %16 = vsyncpa [#allocation3], 0
    %17 = vsyncpa [#allocation6], 0
    %18 = vsyncpa [#allocation9], 0
    %19 = vsyncpa [#allocation12], 0
    %20 = vsyncpa [#allocation4], 0
    // Predicated region
    $region2: #{tpu_custom_call.1} parent=1 // pred_check
      _
    $region3: #{tpu_custom_call.1} parent=1 // pred_check_branch
      %22 = sbr.rel (0) target = $region5
    $region4: #{tpu_custom_call.1} parent=1 // pred_region
      %s24 = ssub.s32 896, 896
      %25 = vsyncadd [#allocation3], %s24
      %s27 = sshll.u32 [#allocation2], 4
      %s28 = int_to_ptr.vmem [resolvable:$true] %s27
      %30 = dma.hbm_to_vmem [thread:$0]  %s0, 896, %s28, [#allocation3]
    $region5: #{tpu_custom_call.1} parent=1 // pred_fallthru
      _
    // Predicated region
    $region6: #{tpu_custom_call.1} parent=1 // pred_check
      _
    $region7: #{tpu_custom_call.1} parent=1 // pred_check_branch
      %32 = sbr.rel (0) target = $region9
    $region8: #{tpu_custom_call.1} parent=1 // pred_region
      %s34 = ssub.s32 6272, 6272
      %35 = vsyncadd [#allocation6], %s34
      %s36 = sshll.u32 [#allocation5], 4
      %s37 = int_to_ptr.vmem [resolvable:$true] %s36
      %42 = dma.hbm_to_vmem [thread:$0]  %s1, 6272, %s37, [#allocation6], 64, 64, 4
    $region9: #{tpu_custom_call.1} parent=1 // pred_fallthru
      _
    // Predicated region
    $region10: #{tpu_custom_call.1} parent=1 // pred_check
      _
    $region11: #{tpu_custom_call.1} parent=1 // pred_check_branch
      %44 = sbr.rel (0) target = $region13
    $region12: #{tpu_custom_call.1} parent=1 // pred_region
      _
    $region13: #{tpu_custom_call.1} parent=1 // pred_fallthru
      _
    // Predicated region
    $region14: #{tpu_custom_call.1} parent=1 // pred_check
      _
    $region15: #{tpu_custom_call.1} parent=1 // pred_check_branch
      %46 = sbr.rel (0) target = $region17
    $region16: #{tpu_custom_call.1} parent=1 // pred_region
      %s48 = ssub.s32 1024, 1024
      %49 = vsyncadd [#allocation6], %s48
      %s50 = sshll.u32 [#allocation7], 4
      %s51 = int_to_ptr.vmem [resolvable:$true] %s50
      %56 = dma.hbm_to_vmem [thread:$0]  %s3, 1024, %s51, [#allocation6], 64, 64, 4
    $region17: #{tpu_custom_call.1} parent=1 // pred_fallthru
      _
    // Predicated region
    $region18: #{tpu_custom_call.1} parent=1 // pred_check
      _
    $region19: #{tpu_custom_call.1} parent=1 // pred_check_branch
      %58 = sbr.rel (0) target = $region21
    $region20: #{tpu_custom_call.1} parent=1 // pred_region
      %s60 = ssub.s32 1024, 1024
      %61 = vsyncadd [#allocation9], %s60
      %s62 = sshll.u32 [#allocation8], 4
      %s63 = int_to_ptr.vmem [resolvable:$true] %s62
      %68 = dma.hbm_to_vmem [thread:$0]  %s4, 1024, %s63, [#allocation9], 64, 64, 4
    $region21: #{tpu_custom_call.1} parent=1 // pred_fallthru
      _
    // Predicated region
    $region22: #{tpu_custom_call.1} parent=1 // pred_check
      _
    $region23: #{tpu_custom_call.1} parent=1 // pred_check_branch
      %70 = sbr.rel (0) target = $region25
    $region24: #{tpu_custom_call.1} parent=1 // pred_region
      _
    $region25: #{tpu_custom_call.1} parent=1 // pred_fallthru
      _
    // Predicated region
    $region26: #{tpu_custom_call.1} parent=1 // pred_check
      _
    $region27: #{tpu_custom_call.1} parent=1 // pred_check_branch
      %72 = sbr.rel (0) target = $region29
    $region28: #{tpu_custom_call.1} parent=1 // pred_region
      %s74 = ssub.s32 1024, 1024
      %75 = vsyncadd [#allocation9], %s74
      %s76 = sshll.u32 [#allocation10], 4
      %s77 = int_to_ptr.vmem [resolvable:$true] %s76
      %82 = dma.hbm_to_vmem [thread:$0]  %s6, 1024, %s77, [#allocation9], 64, 64, 4
    $region29: #{tpu_custom_call.1} parent=1 // pred_fallthru
      _
    // Predicated region
    $region30: #{tpu_custom_call.1} parent=1 // pred_check
      _
    $region31: #{tpu_custom_call.1} parent=1 // pred_check_branch
      %84 = sbr.rel (0) target = $region33
    $region32: #{tpu_custom_call.1} parent=1 // pred_region
      _
    $region33: #{tpu_custom_call.1} parent=1 // pred_fallthru
      _
    // Predicated region
    $region34: #{tpu_custom_call.1} parent=1 // pred_check
      _
    $region35: #{tpu_custom_call.1} parent=1 // pred_check_branch
      %86 = sbr.rel (0) target = $region37
    $region36: #{tpu_custom_call.1} parent=1 // pred_region
      %s88 = ssub.s32 1024, 1024
      %89 = vsyncadd [#allocation12], %s88
      %s90 = sshll.u32 [#allocation11], 4
      %s91 = int_to_ptr.vmem [resolvable:$true] %s90
      %96 = dma.hbm_to_vmem [thread:$0]  %s8, 1024, %s91, [#allocation12], 64, 64, 4
    $region37: #{tpu_custom_call.1} parent=1 // pred_fallthru
      _
    // Predicated region
    $region38: #{tpu_custom_call.1} parent=1 // pred_check
      _
    $region39: #{tpu_custom_call.1} parent=1 // pred_check_branch
      %98 = sbr.rel (0) target = $region41
    $region40: #{tpu_custom_call.1} parent=1 // pred_region
      %s100 = ssub.s32 1024, 1024
      %101 = vsyncadd [#allocation12], %s100
      %s102 = sshll.u32 [#allocation13], 4
      %s103 = int_to_ptr.vmem [resolvable:$true] %s102
      %108 = dma.hbm_to_vmem [thread:$0]  %s9, 1024, %s103, [#allocation12], 64, 64, 4
    $region41: #{tpu_custom_call.1} parent=1 // pred_fallthru
      _
    // Predicated region
    $region42: #{tpu_custom_call.1} parent=1 // pred_check
      _
    $region43: #{tpu_custom_call.1} parent=1 // pred_check_branch
      %110 = sbr.rel (0) target = $region45
    $region44: #{tpu_custom_call.1} parent=1 // pred_region
      _
    $region45: #{tpu_custom_call.1} parent=1 // pred_fallthru
      _
    // Predicated region
    $region46: #{tpu_custom_call.1} parent=1 // pred_check
      _
    $region47: #{tpu_custom_call.1} parent=1 // pred_check_branch
      %112 = sbr.rel (0) target = $region49
    $region48: #{tpu_custom_call.1} parent=1 // pred_region
      %113 = dma.done [#allocation3], 896
    $region49: #{tpu_custom_call.1} parent=1 // pred_fallthru
      _
    // Predicated region
    $region50: #{tpu_custom_call.1} parent=1 // pred_check
      _
    $region51: #{tpu_custom_call.1} parent=1 // pred_check_branch
      %115 = sbr.rel (0) target = $region53
    $region52: #{tpu_custom_call.1} parent=1 // pred_region
      %116 = dma.done [#allocation6], 6272
    $region53: #{tpu_custom_call.1} parent=1 // pred_fallthru
      _
    // Predicated region
    $region54: #{tpu_custom_call.1} parent=1 // pred_check
      _
    $region55: #{tpu_custom_call.1} parent=1 // pred_check_branch
      %118 = sbr.rel (0) target = $region57
    $region56: #{tpu_custom_call.1} parent=1 // pred_region
      %119 = dma.done [#allocation6], 1024
    $region57: #{tpu_custom_call.1} parent=1 // pred_fallthru
      _
    // Predicated region
    $region58: #{tpu_custom_call.1} parent=1 // pred_check
      _
    $region59: #{tpu_custom_call.1} parent=1 // pred_check_branch
      %121 = sbr.rel (0) target = $region61
    $region60: #{tpu_custom_call.1} parent=1 // pred_region
      %122 = dma.done [#allocation9], 1024
    $region61: #{tpu_custom_call.1} parent=1 // pred_fallthru
      _
    // Predicated region
    $region62: #{tpu_custom_call.1} parent=1 // pred_check
      _
    $region63: #{tpu_custom_call.1} parent=1 // pred_check_branch
      %124 = sbr.rel (0) target = $region65
    $region64: #{tpu_custom_call.1} parent=1 // pred_region
      %125 = dma.done [#allocation9], 1024
    $region65: #{tpu_custom_call.1} parent=1 // pred_fallthru
      _
    // Predicated region
    $region66: #{tpu_custom_call.1} parent=1 // pred_check
      _
    $region67: #{tpu_custom_call.1} parent=1 // pred_check_branch
      %127 = sbr.rel (0) target = $region69
    $region68: #{tpu_custom_call.1} parent=1 // pred_region
      %128 = dma.done [#allocation12], 1024
    $region69: #{tpu_custom_call.1} parent=1 // pred_fallthru
      _
    // Predicated region
    $region70: #{tpu_custom_call.1} parent=1 // pred_check
      _
    $region71: #{tpu_custom_call.1} parent=1 // pred_check_branch
      %130 = sbr.rel (0) target = $region73
    $region72: #{tpu_custom_call.1} parent=1 // pred_region
      %131 = dma.done [#allocation12], 1024
    $region73: #{tpu_custom_call.1} parent=1 // pred_fallthru
      _
    %v133 = vld [vmem:[#allocation2] sm:$0xff]
    %v134 = vld [vmem:[#allocation2 + $0x8] sm:$0xff]
    %v135 = vld [vmem:[#allocation2 + $0x10] sm:$0xff]
    %v136 = vld [vmem:[#allocation2 + $0x18] sm:$0xff]
    %v137 = vld [vmem:[#allocation2 + $0x20] sm:$0xff]
    %v138 = vld [vmem:[#allocation2 + $0x28] sm:$0xff]
    %v139 = vld [vmem:[#allocation2 + $0x30] sm:$0xff]
    %v140 = vpack.c.bf16 %v133, %v133
    %v141 = vpack.c.bf16 %v134, %v134
    %v142 = vpack.c.bf16 %v135, %v135
    %v143 = vpack.c.bf16 %v136, %v136
    %v144 = vpack.c.bf16 %v137, %v137
    %v145 = vpack.c.bf16 %v138, %v138
    %v146 = vpack.c.bf16 %v139, %v139
    %v147 = vld [vmem:[#allocation5] sm:$0xf]
    %v148 = vld [vmem:[#allocation5 + $0x4] sm:$0xf]
    %v149 = vld [vmem:[#allocation5 + $0x8] sm:$0xf]
    %v150 = vld [vmem:[#allocation5 + $0xc] sm:$0xf]
    %v151 = vld [vmem:[#allocation5 + $0x10] sm:$0xf]
    %v152 = vld [vmem:[#allocation5 + $0x14] sm:$0xf]
    %v153 = vld [vmem:[#allocation5 + $0x18] sm:$0xf]
    %v154 = vld [vmem:[#allocation5 + $0x1c] sm:$0xf]
    %v155 = vld [vmem:[#allocation5 + $0x20] sm:$0xf]
    %v156 = vld [vmem:[#allocation5 + $0x24] sm:$0xf]
    %v157 = vld [vmem:[#allocation5 + $0x28] sm:$0xf]
    %v158 = vld [vmem:[#allocation5 + $0x2c] sm:$0xf]
    %v159 = vld [vmem:[#allocation5 + $0x30] sm:$0xf]
    %v160 = vld [vmem:[#allocation5 + $0x34] sm:$0xf]
    %v161 = vld [vmem:[#allocation5 + $0x38] sm:$0xf]
    %v162 = vld [vmem:[#allocation5 + $0x3c] sm:$0xf]
    %v163 = vld [vmem:[#allocation5 + $0x40] sm:$0xf]
    %v164 = vld [vmem:[#allocation5 + $0x44] sm:$0xf]
    %v165 = vld [vmem:[#allocation5 + $0x48] sm:$0xf]
    %v166 = vld [vmem:[#allocation5 + $0x4c] sm:$0xf]
    %v167 = vld [vmem:[#allocation5 + $0x50] sm:$0xf]
    %v168 = vld [vmem:[#allocation5 + $0x54] sm:$0xf]
    %v169 = vld [vmem:[#allocation5 + $0x58] sm:$0xf]
    %v170 = vld [vmem:[#allocation5 + $0x5c] sm:$0xf]
    %v171 = vld [vmem:[#allocation5 + $0x60] sm:$0xf]
    %v172 = vld [vmem:[#allocation5 + $0x64] sm:$0xf]
    %v173 = vld [vmem:[#allocation5 + $0x68] sm:$0xf]
    %v174 = vld [vmem:[#allocation5 + $0x6c] sm:$0xf]
    %v175 = vld [vmem:[#allocation5 + $0x70] sm:$0xf]
    %v176 = vld [vmem:[#allocation5 + $0x74] sm:$0xf]
    %v177 = vld [vmem:[#allocation5 + $0x78] sm:$0xf]
    %v178 = vld [vmem:[#allocation5 + $0x7c] sm:$0xf]
    %v179 = vld [vmem:[#allocation5 + $0x80] sm:$0xf]
    %v180 = vld [vmem:[#allocation5 + $0x84] sm:$0xf]
    %v181 = vld [vmem:[#allocation5 + $0x88] sm:$0xf]
    %v182 = vld [vmem:[#allocation5 + $0x8c] sm:$0xf]
    %v183 = vld [vmem:[#allocation5 + $0x90] sm:$0xf]
    %v184 = vld [vmem:[#allocation5 + $0x94] sm:$0xf]
    %v185 = vld [vmem:[#allocation5 + $0x98] sm:$0xf]
    %v186 = vld [vmem:[#allocation5 + $0x9c] sm:$0xf]
    %v187 = vld [vmem:[#allocation5 + $0xa0] sm:$0xf]
    %v188 = vld [vmem:[#allocation5 + $0xa4] sm:$0xf]
    %v189 = vld [vmem:[#allocation5 + $0xa8] sm:$0xf]
    %v190 = vld [vmem:[#allocation5 + $0xac] sm:$0xf]
    %v191 = vld [vmem:[#allocation5 + $0xb0] sm:$0xf]
    %v192 = vld [vmem:[#allocation5 + $0xb4] sm:$0xf]
    %v193 = vld [vmem:[#allocation5 + $0xb8] sm:$0xf]
    %v194 = vld [vmem:[#allocation5 + $0xbc] sm:$0xf]
    %v195 = vld [vmem:[#allocation5 + $0xc0] sm:$0xf]
    %v196 = vld [vmem:[#allocation5 + $0xc4] sm:$0xf]
    %v197 = vld [vmem:[#allocation5 + $0xc8] sm:$0xf]
    %v198 = vld [vmem:[#allocation5 + $0xcc] sm:$0xf]
    %v199 = vld [vmem:[#allocation5 + $0xd0] sm:$0xf]
    %v200 = vld [vmem:[#allocation5 + $0xd4] sm:$0xf]
    %v201 = vld [vmem:[#allocation5 + $0xd8] sm:$0xf]
    %v202 = vld [vmem:[#allocation5 + $0xdc] sm:$0xf]
    %v203 = vld [vmem:[#allocation5 + $0xe0] sm:$0xf]
    %v204 = vld [vmem:[#allocation5 + $0xe4] sm:$0xf]
    %v205 = vld [vmem:[#allocation5 + $0xe8] sm:$0xf]
    %v206 = vld [vmem:[#allocation5 + $0xec] sm:$0xf]
    %v207 = vld [vmem:[#allocation5 + $0xf0] sm:$0xf]
    %v208 = vld [vmem:[#allocation5 + $0xf4] sm:$0xf]
    %v209 = vld [vmem:[#allocation5 + $0xf8] sm:$0xf]
    %v210 = vld [vmem:[#allocation5 + $0xfc] sm:$0xf]
    %v211 = vld [vmem:[#allocation5 + $0x100] sm:$0xf]
    %v212 = vld [vmem:[#allocation5 + $0x104] sm:$0xf]
    %v213 = vld [vmem:[#allocation5 + $0x108] sm:$0xf]
    %v214 = vld [vmem:[#allocation5 + $0x10c] sm:$0xf]
    %v215 = vld [vmem:[#allocation5 + $0x110] sm:$0xf]
    %v216 = vld [vmem:[#allocation5 + $0x114] sm:$0xf]
    %v217 = vld [vmem:[#allocation5 + $0x118] sm:$0xf]
    %v218 = vld [vmem:[#allocation5 + $0x11c] sm:$0xf]
    %v219 = vld [vmem:[#allocation5 + $0x120] sm:$0xf]
    %v220 = vld [vmem:[#allocation5 + $0x124] sm:$0xf]
    %v221 = vld [vmem:[#allocation5 + $0x128] sm:$0xf]
    %v222 = vld [vmem:[#allocation5 + $0x12c] sm:$0xf]
    %v223 = vld [vmem:[#allocation5 + $0x130] sm:$0xf]
    %v224 = vld [vmem:[#allocation5 + $0x134] sm:$0xf]
    %v225 = vld [vmem:[#allocation5 + $0x138] sm:$0xf]
    %v226 = vld [vmem:[#allocation5 + $0x13c] sm:$0xf]
    %v227 = vld [vmem:[#allocation5 + $0x140] sm:$0xf]
    %v228 = vld [vmem:[#allocation5 + $0x144] sm:$0xf]
    %v229 = vld [vmem:[#allocation5 + $0x148] sm:$0xf]
    %v230 = vld [vmem:[#allocation5 + $0x14c] sm:$0xf]
    %v231 = vld [vmem:[#allocation5 + $0x150] sm:$0xf]
    %v232 = vld [vmem:[#allocation5 + $0x154] sm:$0xf]
    %v233 = vld [vmem:[#allocation5 + $0x158] sm:$0xf]
    %v234 = vld [vmem:[#allocation5 + $0x15c] sm:$0xf]
    %v235 = vld [vmem:[#allocation5 + $0x160] sm:$0xf]
    %v236 = vld [vmem:[#allocation5 + $0x164] sm:$0xf]
    %v237 = vld [vmem:[#allocation5 + $0x168] sm:$0xf]
    %v238 = vld [vmem:[#allocation5 + $0x16c] sm:$0xf]
    %v239 = vld [vmem:[#allocation5 + $0x170] sm:$0xf]
    %v240 = vld [vmem:[#allocation5 + $0x174] sm:$0xf]
    %v241 = vld [vmem:[#allocation5 + $0x178] sm:$0xf]
    %v242 = vld [vmem:[#allocation5 + $0x17c] sm:$0xf]
    %v243 = vld [vmem:[#allocation5 + $0x180] sm:$0xf]
    %v244 = vld [vmem:[#allocation5 + $0x184] sm:$0xf]
    %v245 = vld [vmem:[%s2] sm:$0x1]
    %v247 = vlaneseq
    %v248 = vshrl.u32 %v247, 7
    %v249 = vsub.s32 0, %v248
    %v250 = vrot.slane %v245, %v249
    %v350 = vunpack.c.l.b16 %v147
    %v351 = vunpack.c.l.b16 %v148
    %v352 = vunpack.c.l.b16 %v149
    %v353 = vunpack.c.l.b16 %v150
    %v354 = vunpack.c.l.b16 %v151
    %v355 = vunpack.c.l.b16 %v152
    %v356 = vunpack.c.l.b16 %v153
    %v357 = vunpack.c.l.b16 %v154
    %v358 = vunpack.c.l.b16 %v155
    %v359 = vunpack.c.l.b16 %v156
    %v360 = vunpack.c.l.b16 %v157
    %v361 = vunpack.c.l.b16 %v158
    %v362 = vunpack.c.l.b16 %v159
    %v363 = vunpack.c.l.b16 %v160
    %v364 = vunpack.c.l.b16 %v161
    %v365 = vunpack.c.l.b16 %v162
    %v366 = vunpack.c.l.b16 %v163
    %v367 = vunpack.c.l.b16 %v164
    %v368 = vunpack.c.l.b16 %v165
    %v369 = vunpack.c.l.b16 %v166
    %v370 = vunpack.c.l.b16 %v167
    %v371 = vunpack.c.l.b16 %v168
    %v372 = vunpack.c.l.b16 %v169
    %v373 = vunpack.c.l.b16 %v170
    %v374 = vunpack.c.l.b16 %v171
    %v375 = vunpack.c.l.b16 %v172
    %v376 = vunpack.c.l.b16 %v173
    %v377 = vunpack.c.l.b16 %v174
    %v378 = vunpack.c.l.b16 %v175
    %v379 = vunpack.c.l.b16 %v176
    %v380 = vunpack.c.l.b16 %v177
    %v381 = vunpack.c.l.b16 %v178
    %v382 = vunpack.c.l.b16 %v179
    %v383 = vunpack.c.l.b16 %v180
    %v384 = vunpack.c.l.b16 %v181
    %v385 = vunpack.c.l.b16 %v182
    %v386 = vunpack.c.l.b16 %v183
    %v387 = vunpack.c.l.b16 %v184
    %v388 = vunpack.c.l.b16 %v185
    %v389 = vunpack.c.l.b16 %v186
    %v390 = vunpack.c.l.b16 %v187
    %v391 = vunpack.c.l.b16 %v188
    %v392 = vunpack.c.l.b16 %v189
    %v393 = vunpack.c.l.b16 %v190
    %v394 = vunpack.c.l.b16 %v191
    %v395 = vunpack.c.l.b16 %v192
    %v396 = vunpack.c.l.b16 %v193
    %v397 = vunpack.c.l.b16 %v194
    %v398 = vunpack.c.l.b16 %v195
    %v399 = vunpack.c.l.b16 %v196
    %v400 = vunpack.c.l.b16 %v197
    %v401 = vunpack.c.l.b16 %v198
    %v402 = vunpack.c.l.b16 %v199
    %v403 = vunpack.c.l.b16 %v200
    %v404 = vunpack.c.l.b16 %v201
    %v405 = vunpack.c.l.b16 %v202
    %v406 = vunpack.c.l.b16 %v203
    %v407 = vunpack.c.l.b16 %v204
    %v408 = vunpack.c.l.b16 %v205
    %v409 = vunpack.c.l.b16 %v206
    %v410 = vunpack.c.l.b16 %v207
    %v411 = vunpack.c.l.b16 %v208
    %v412 = vunpack.c.l.b16 %v209
    %v413 = vunpack.c.l.b16 %v210
    %v414 = vunpack.c.l.b16 %v211
    %v415 = vunpack.c.l.b16 %v212
    %v416 = vunpack.c.l.b16 %v213
    %v417 = vunpack.c.l.b16 %v214
    %v418 = vunpack.c.l.b16 %v215
    %v419 = vunpack.c.l.b16 %v216
    %v420 = vunpack.c.l.b16 %v217
    %v421 = vunpack.c.l.b16 %v218
    %v422 = vunpack.c.l.b16 %v219
    %v423 = vunpack.c.l.b16 %v220
    %v424 = vunpack.c.l.b16 %v221
    %v425 = vunpack.c.l.b16 %v222
    %v426 = vunpack.c.l.b16 %v223
    %v427 = vunpack.c.l.b16 %v224
    %v428 = vunpack.c.l.b16 %v225
    %v429 = vunpack.c.l.b16 %v226
    %v430 = vunpack.c.l.b16 %v227
    %v431 = vunpack.c.l.b16 %v228
    %v432 = vunpack.c.l.b16 %v229
    %v433 = vunpack.c.l.b16 %v230
    %v434 = vunpack.c.l.b16 %v231
    %v435 = vunpack.c.l.b16 %v232
    %v436 = vunpack.c.l.b16 %v233
    %v437 = vunpack.c.l.b16 %v234
    %v438 = vunpack.c.l.b16 %v235
    %v439 = vunpack.c.l.b16 %v236
    %v440 = vunpack.c.l.b16 %v237
    %v441 = vunpack.c.l.b16 %v238
    %v442 = vunpack.c.l.b16 %v239
    %v443 = vunpack.c.l.b16 %v240
    %v444 = vunpack.c.l.b16 %v241
    %v445 = vunpack.c.l.b16 %v242
    %v446 = vunpack.c.l.b16 %v243
    %v447 = vunpack.c.l.b16 %v244
    %v448 = vpack.c.b16 %v351, %v350
    %v449 = vpack.c.b16 %v353, %v352
    %v450 = vpack.c.b16 %v355, %v354
    %v451 = vpack.c.b16 %v357, %v356
    %v452 = vpack.c.b16 %v359, %v358
    %v453 = vpack.c.b16 %v361, %v360
    %v454 = vpack.c.b16 %v363, %v362
    %v455 = vpack.c.b16 %v365, %v364
    %v456 = vpack.c.b16 %v367, %v366
    %v457 = vpack.c.b16 %v369, %v368
    %v458 = vpack.c.b16 %v371, %v370
    %v459 = vpack.c.b16 %v373, %v372
    %v460 = vpack.c.b16 %v375, %v374
    %v461 = vpack.c.b16 %v377, %v376
    %v462 = vpack.c.b16 %v379, %v378
    %v463 = vpack.c.b16 %v381, %v380
    %v464 = vpack.c.b16 %v383, %v382
    %v465 = vpack.c.b16 %v385, %v384
    %v466 = vpack.c.b16 %v387, %v386
    %v467 = vpack.c.b16 %v389, %v388
    %v468 = vpack.c.b16 %v391, %v390
    %v469 = vpack.c.b16 %v393, %v392
    %v470 = vpack.c.b16 %v395, %v394
    %v471 = vpack.c.b16 %v397, %v396
    %v472 = vpack.c.b16 %v399, %v398
    %v473 = vpack.c.b16 %v401, %v400
    %v474 = vpack.c.b16 %v403, %v402
    %v475 = vpack.c.b16 %v405, %v404
    %v476 = vpack.c.b16 %v407, %v406
    %v477 = vpack.c.b16 %v409, %v408
    %v478 = vpack.c.b16 %v411, %v410
    %v479 = vpack.c.b16 %v413, %v412
    %v480 = vpack.c.b16 %v415, %v414
    %v481 = vpack.c.b16 %v417, %v416
    %v482 = vpack.c.b16 %v419, %v418
    %v483 = vpack.c.b16 %v421, %v420
    %v484 = vpack.c.b16 %v423, %v422
    %v485 = vpack.c.b16 %v425, %v424
    %v486 = vpack.c.b16 %v427, %v426
    %v487 = vpack.c.b16 %v429, %v428
    %v488 = vpack.c.b16 %v431, %v430
    %v489 = vpack.c.b16 %v433, %v432
    %v490 = vpack.c.b16 %v435, %v434
    %v491 = vpack.c.b16 %v437, %v436
    %v492 = vpack.c.b16 %v439, %v438
    %v493 = vpack.c.b16 %v441, %v440
    %v494 = vpack.c.b16 %v443, %v442
    %v495 = vpack.c.b16 %v445, %v444
    %v496 = vpack.c.b16 %v447, %v446
    %vm546 = vcmask 130048
    %v548 = vsel %vm546, %v146, 0
    %550 = vmatprep.subr.bf16.mxu0 0
    %551 = vmatpush1.bf16.msra.mxu0 %v448
    %552 = vmatprep.subr.bf16.mxu0 0
    %553 = vmatpush1.bf16.msra.mxu0 %v449
    %554 = vmatprep.subr.bf16.mxu0 0
    %555 = vmatpush1.bf16.msra.mxu0 %v450
    %556 = vmatprep.subr.bf16.mxu0 0
    %557 = vmatpush1.bf16.msra.mxu0 %v451
    %558 = vmatprep.subr.bf16.mxu0 0
    %559 = vmatpush1.bf16.msra.mxu0 %v452
    %560 = vmatprep.subr.bf16.mxu0 0
    %561 = vmatpush1.bf16.msra.mxu0 %v453
    %562 = vmatprep.subr.bf16.mxu0 0
    %563 = vmatpush1.bf16.msra.mxu0 %v454
    %564 = vmatprep.subr.bf16.mxu0 0
    %565 = vmatpush1.bf16.msra.mxu0 %v455
    %566 = vmatprep.subr.bf16.mxu0 0
    %567 = vmatpush1.bf16.msra.mxu0 %v456
    %568 = vmatprep.subr.bf16.mxu0 0
    %569 = vmatpush1.bf16.msra.mxu0 %v457
    %570 = vmatprep.subr.bf16.mxu0 0
    %571 = vmatpush1.bf16.msra.mxu0 %v458
    %572 = vmatprep.subr.bf16.mxu0 0
    %573 = vmatpush1.bf16.msra.mxu0 %v459
    %574 = vmatprep.subr.bf16.mxu0 0
    %575 = vmatpush1.bf16.msra.mxu0 %v460
    %576 = vmatprep.subr.bf16.mxu0 0
    %577 = vmatpush1.bf16.msra.mxu0 %v461
    %578 = vmatprep.subr.bf16.mxu0 0
    %579 = vmatpush1.bf16.msra.mxu0 %v462
    %580 = vmatprep.subr.bf16.mxu0 0
    %581 = vmatpush1.bf16.msra.mxu0 %v463
    %582 = vmatprep.mubr.bf16.mxu0 %v141
    %583 = vmatmul.mubr.bf16.gmra.mrb[0].mxu0 %v140
    %v584 = vpop.f32.mrb[0].mxu0
    %v585 = vadd.f32 %v250, %v584
    %v586 = vpop.f32.mrb[0].mxu0
    %v587 = vpop.f32.mrb[0].mxu0
    %v588 = vpop.f32.mrb[0].mxu0
    %589 = vdwg.mxu0
    %590 = vmatprep.subr.bf16.mxu0 0
    %591 = vmatpush1.bf16.msra.mxu0 %v464
    %592 = vmatprep.subr.bf16.mxu0 0
    %593 = vmatpush1.bf16.msra.mxu0 %v465
    %594 = vmatprep.subr.bf16.mxu0 0
    %595 = vmatpush1.bf16.msra.mxu0 %v466
    %596 = vmatprep.subr.bf16.mxu0 0
    %597 = vmatpush1.bf16.msra.mxu0 %v467
    %598 = vmatprep.subr.bf16.mxu0 0
    %599 = vmatpush1.bf16.msra.mxu0 %v468
    %600 = vmatprep.subr.bf16.mxu0 0
    %601 = vmatpush1.bf16.msra.mxu0 %v469
    %602 = vmatprep.subr.bf16.mxu0 0
    %603 = vmatpush1.bf16.msra.mxu0 %v470
    %604 = vmatprep.subr.bf16.mxu0 0
    %605 = vmatpush1.bf16.msra.mxu0 %v471
    %606 = vmatprep.subr.bf16.mxu0 0
    %607 = vmatpush1.bf16.msra.mxu0 %v472
    %608 = vmatprep.subr.bf16.mxu0 0
    %609 = vmatpush1.bf16.msra.mxu0 %v473
    %610 = vmatprep.subr.bf16.mxu0 0
    %611 = vmatpush1.bf16.msra.mxu0 %v474
    %612 = vmatprep.subr.bf16.mxu0 0
    %613 = vmatpush1.bf16.msra.mxu0 %v475
    %614 = vmatprep.subr.bf16.mxu0 0
    %615 = vmatpush1.bf16.msra.mxu0 %v476
    %616 = vmatprep.subr.bf16.mxu0 0
    %617 = vmatpush1.bf16.msra.mxu0 %v477
    %618 = vmatprep.subr.bf16.mxu0 0
    %619 = vmatpush1.bf16.msra.mxu0 %v478
    %620 = vmatprep.subr.bf16.mxu0 0
    %621 = vmatpush1.bf16.msra.mxu0 %v479
    %622 = vmatprep.mubr.bf16.mxu0 %v143
    %623 = vmatmul.mubr.bf16.gmra.mrb[0].mxu0 %v142
    %v624 = vpop.f32.mrb[0].mxu0
    %v625 = vadd.f32 %v585, %v624
    %v626 = vpop.f32.mrb[0].mxu0
    %v627 = vpop.f32.mrb[0].mxu0
    %v628 = vpop.f32.mrb[0].mxu0
    %629 = vdwg.mxu0
    %630 = vmatprep.subr.bf16.mxu0 0
    %631 = vmatpush1.bf16.msra.mxu0 %v480
    %632 = vmatprep.subr.bf16.mxu0 0
    %633 = vmatpush1.bf16.msra.mxu0 %v481
    %634 = vmatprep.subr.bf16.mxu0 0
    %635 = vmatpush1.bf16.msra.mxu0 %v482
    %636 = vmatprep.subr.bf16.mxu0 0
    %637 = vmatpush1.bf16.msra.mxu0 %v483
    %638 = vmatprep.subr.bf16.mxu0 0
    %639 = vmatpush1.bf16.msra.mxu0 %v484
    %640 = vmatprep.subr.bf16.mxu0 0
    %641 = vmatpush1.bf16.msra.mxu0 %v485
    %642 = vmatprep.subr.bf16.mxu0 0
    %643 = vmatpush1.bf16.msra.mxu0 %v486
    %644 = vmatprep.subr.bf16.mxu0 0
    %645 = vmatpush1.bf16.msra.mxu0 %v487
    %646 = vmatprep.subr.bf16.mxu0 0
    %647 = vmatpush1.bf16.msra.mxu0 %v488
    %648 = vmatprep.subr.bf16.mxu0 0
    %649 = vmatpush1.bf16.msra.mxu0 %v489
    %650 = vmatprep.subr.bf16.mxu0 0
    %651 = vmatpush1.bf16.msra.mxu0 %v490
    %652 = vmatprep.subr.bf16.mxu0 0
    %653 = vmatpush1.bf16.msra.mxu0 %v491
    %654 = vmatprep.subr.bf16.mxu0 0
    %655 = vmatpush1.bf16.msra.mxu0 %v492
    %656 = vmatprep.subr.bf16.mxu0 0
    %657 = vmatpush1.bf16.msra.mxu0 %v493
    %658 = vmatprep.subr.bf16.mxu0 0
    %659 = vmatpush1.bf16.msra.mxu0 %v494
    %660 = vmatprep.subr.bf16.mxu0 0
    %661 = vmatpush1.bf16.msra.mxu0 %v495
    %662 = vmatprep.mubr.bf16.mxu0 %v145
    %663 = vmatmul.mubr.bf16.gmra.mrb[0].mxu0 %v144
    %v664 = vpop.f32.mrb[0].mxu0
    %v665 = vadd.f32 %v625, %v664
    %v666 = vpop.f32.mrb[0].mxu0
    %v667 = vpop.f32.mrb[0].mxu0
    %v668 = vpop.f32.mrb[0].mxu0
    %669 = vdwg.mxu0
    %670 = vmatprep.subr.bf16.mxu0 0
    %671 = vmatpush1.bf16.msra.mxu0 %v496
    %672 = vmatprep.subr.bf16.mxu0 0
    %673 = vmatpush1.bf16.msra.mxu0 0
    %674 = vmatprep.subr.bf16.mxu0 0
    %675 = vmatpush1.bf16.msra.mxu0 0
    %676 = vmatprep.subr.bf16.mxu0 0
    %677 = vmatpush1.bf16.msra.mxu0 0
    %678 = vmatprep.subr.bf16.mxu0 0
    %679 = vmatpush1.bf16.msra.mxu0 0
    %680 = vmatprep.subr.bf16.mxu0 0
    %681 = vmatpush1.bf16.msra.mxu0 0
    %682 = vmatprep.subr.bf16.mxu0 0
    %683 = vmatpush1.bf16.msra.mxu0 0
    %684 = vmatprep.subr.bf16.mxu0 0
    %685 = vmatpush1.bf16.msra.mxu0 0
    %686 = vmatprep.subr.bf16.mxu0 0
    %687 = vmatpush1.bf16.msra.mxu0 0
    %688 = vmatprep.subr.bf16.mxu0 0
    %689 = vmatpush1.bf16.msra.mxu0 0
    %690 = vmatprep.subr.bf16.mxu0 0
    %691 = vmatpush1.bf16.msra.mxu0 0
    %692 = vmatprep.subr.bf16.mxu0 0
    %693 = vmatpush1.bf16.msra.mxu0 0
    %694 = vmatprep.subr.bf16.mxu0 0
    %695 = vmatpush1.bf16.msra.mxu0 0
    %696 = vmatprep.subr.bf16.mxu0 0
    %697 = vmatpush1.bf16.msra.mxu0 0
    %698 = vmatprep.subr.bf16.mxu0 0
    %699 = vmatpush1.bf16.msra.mxu0 0
    %700 = vmatprep.subr.bf16.mxu0 0
    %701 = vmatpush1.bf16.msra.mxu0 0
    %702 = vmatprep.mubr.bf16.mxu0 0
    %703 = vmatmul.mubr.bf16.gmra.mrb[0].mxu0 %v548
    %v704 = vpop.f32.mrb[0].mxu0
    %v705 = vadd.f32 %v665, %v704
    %v706 = vpop.f32.mrb[0].mxu0
    %v707 = vpop.f32.mrb[0].mxu0
    %v708 = vpop.f32.mrb[0].mxu0
    %709 = vdwg.mxu0
    %vm710 = vcmp.gt.f32.partialorder %v705, 0.0
    %v711 = vmul.f32 %v705, 1.442695
    %v712 = vpow.pop %v711
    %v713 = vsub.f32 %v712, 1.0
    %v714 = vmul.f32 %v713, 1.6732632
    %v715 = vsel %vm710, %v705, %v714
    %v716 = vmul.f32 %v715, 1.050701
    %v717 = vpack.c.bf16 %v716, %v716
    %v718 = vld [vmem:[#allocation7] sm:$0xf]
    %v719 = vld [vmem:[#allocation7 + $0x4] sm:$0xf]
    %v720 = vld [vmem:[#allocation7 + $0x8] sm:$0xf]
    %v721 = vld [vmem:[#allocation7 + $0xc] sm:$0xf]
    %v722 = vld [vmem:[#allocation7 + $0x10] sm:$0xf]
    %v723 = vld [vmem:[#allocation7 + $0x14] sm:$0xf]
    %v724 = vld [vmem:[#allocation7 + $0x18] sm:$0xf]
    %v725 = vld [vmem:[#allocation7 + $0x1c] sm:$0xf]
    %v726 = vld [vmem:[#allocation7 + $0x20] sm:$0xf]
    %v727 = vld [vmem:[#allocation7 + $0x24] sm:$0xf]
    %v728 = vld [vmem:[#allocation7 + $0x28] sm:$0xf]
    %v729 = vld [vmem:[#allocation7 + $0x2c] sm:$0xf]
    %v730 = vld [vmem:[#allocation7 + $0x30] sm:$0xf]
    %v731 = vld [vmem:[#allocation7 + $0x34] sm:$0xf]
    %v732 = vld [vmem:[#allocation7 + $0x38] sm:$0xf]
    %v733 = vld [vmem:[#allocation7 + $0x3c] sm:$0xf]
    %v750 = vunpack.c.l.b16 %v718
    %v751 = vunpack.c.l.b16 %v719
    %v752 = vunpack.c.l.b16 %v720
    %v753 = vunpack.c.l.b16 %v721
    %v754 = vunpack.c.l.b16 %v722
    %v755 = vunpack.c.l.b16 %v723
    %v756 = vunpack.c.l.b16 %v724
    %v757 = vunpack.c.l.b16 %v725
    %v758 = vunpack.c.l.b16 %v726
    %v759 = vunpack.c.l.b16 %v727
    %v760 = vunpack.c.l.b16 %v728
    %v761 = vunpack.c.l.b16 %v729
    %v762 = vunpack.c.l.b16 %v730
    %v763 = vunpack.c.l.b16 %v731
    %v764 = vunpack.c.l.b16 %v732
    %v765 = vunpack.c.l.b16 %v733
    %v766 = vpack.c.b16 %v751, %v750
    %v767 = vpack.c.b16 %v753, %v752
    %v768 = vpack.c.b16 %v755, %v754
    %v769 = vpack.c.b16 %v757, %v756
    %v770 = vpack.c.b16 %v759, %v758
    %v771 = vpack.c.b16 %v761, %v760
    %v772 = vpack.c.b16 %v763, %v762
    %v773 = vpack.c.b16 %v765, %v764
    %782 = vmatprep.subr.bf16.mxu0 0
    %783 = vmatpush1.bf16.msra.mxu0 %v766
    %784 = vmatprep.subr.bf16.mxu0 0
    %785 = vmatpush1.bf16.msra.mxu0 %v767
    %786 = vmatprep.subr.bf16.mxu0 0
    %787 = vmatpush1.bf16.msra.mxu0 %v768
    %788 = vmatprep.subr.bf16.mxu0 0
    %789 = vmatpush1.bf16.msra.mxu0 %v769
    %790 = vmatprep.subr.bf16.mxu0 0
    %791 = vmatpush1.bf16.msra.mxu0 %v770
    %792 = vmatprep.subr.bf16.mxu0 0
    %793 = vmatpush1.bf16.msra.mxu0 %v771
    %794 = vmatprep.subr.bf16.mxu0 0
    %795 = vmatpush1.bf16.msra.mxu0 %v772
    %796 = vmatprep.subr.bf16.mxu0 0
    %797 = vmatpush1.bf16.msra.mxu0 %v773
    %798 = vmatprep.subr.bf16.mxu0 0
    %799 = vmatpush1.bf16.msra.mxu0 0
    %800 = vmatprep.subr.bf16.mxu0 0
    %801 = vmatpush1.bf16.msra.mxu0 0
    %802 = vmatprep.subr.bf16.mxu0 0
    %803 = vmatpush1.bf16.msra.mxu0 0
    %804 = vmatprep.subr.bf16.mxu0 0
    %805 = vmatpush1.bf16.msra.mxu0 0
    %806 = vmatprep.subr.bf16.mxu0 0
    %807 = vmatpush1.bf16.msra.mxu0 0
    %808 = vmatprep.subr.bf16.mxu0 0
    %809 = vmatpush1.bf16.msra.mxu0 0
    %810 = vmatprep.subr.bf16.mxu0 0
    %811 = vmatpush1.bf16.msra.mxu0 0
    %812 = vmatprep.subr.bf16.mxu0 0
    %813 = vmatpush1.bf16.msra.mxu0 0
    %814 = vmatprep.mubr.bf16.mxu0 0
    %815 = vmatmul.mubr.bf16.gmra.mrb[0].mxu0 %v717
    %v816 = vpop.f32.mrb[0].mxu0
    %v817 = vadd.f32 0.0, %v816
    %v818 = vpop.f32.mrb[0].mxu0
    %v819 = vpop.f32.mrb[0].mxu0
    %v820 = vpop.f32.mrb[0].mxu0
    %821 = vdwg.mxu0
    %vm822 = vcmp.gt.f32.partialorder %v817, 0.0
    %v823 = vmul.f32 %v817, 1.442695
    %v824 = vpow.pop %v823
    %v825 = vsub.f32 %v824, 1.0
    %v826 = vmul.f32 %v825, 1.6732632
    %v827 = vsel %vm822, %v817, %v826
    %v828 = vmul.f32 %v827, 1.050701
    %v829 = vpack.c.bf16 %v828, %v828
    %v830 = vld [vmem:[#allocation8] sm:$0xf]
    %v831 = vld [vmem:[#allocation8 + $0x4] sm:$0xf]
    %v832 = vld [vmem:[#allocation8 + $0x8] sm:$0xf]
    %v833 = vld [vmem:[#allocation8 + $0xc] sm:$0xf]
    %v834 = vld [vmem:[#allocation8 + $0x10] sm:$0xf]
    %v835 = vld [vmem:[#allocation8 + $0x14] sm:$0xf]
    %v836 = vld [vmem:[#allocation8 + $0x18] sm:$0xf]
    %v837 = vld [vmem:[#allocation8 + $0x1c] sm:$0xf]
    %v838 = vld [vmem:[#allocation8 + $0x20] sm:$0xf]
    %v839 = vld [vmem:[#allocation8 + $0x24] sm:$0xf]
    %v840 = vld [vmem:[#allocation8 + $0x28] sm:$0xf]
    %v841 = vld [vmem:[#allocation8 + $0x2c] sm:$0xf]
    %v842 = vld [vmem:[#allocation8 + $0x30] sm:$0xf]
    %v843 = vld [vmem:[#allocation8 + $0x34] sm:$0xf]
    %v844 = vld [vmem:[#allocation8 + $0x38] sm:$0xf]
    %v845 = vld [vmem:[#allocation8 + $0x3c] sm:$0xf]
    %v846 = vld [vmem:[%s5] sm:$0x1]
    %v848 = vlaneseq
    %v849 = vshrl.u32 %v848, 7
    %v850 = vsub.s32 0, %v849
    %v851 = vrot.slane %v846, %v850
    %v869 = vunpack.c.l.b16 %v830
    %v870 = vunpack.c.l.b16 %v831
    %v871 = vunpack.c.l.b16 %v832
    %v872 = vunpack.c.l.b16 %v833
    %v873 = vunpack.c.l.b16 %v834
    %v874 = vunpack.c.l.b16 %v835
    %v875 = vunpack.c.l.b16 %v836
    %v876 = vunpack.c.l.b16 %v837
    %v877 = vunpack.c.l.b16 %v838
    %v878 = vunpack.c.l.b16 %v839
    %v879 = vunpack.c.l.b16 %v840
    %v880 = vunpack.c.l.b16 %v841
    %v881 = vunpack.c.l.b16 %v842
    %v882 = vunpack.c.l.b16 %v843
    %v883 = vunpack.c.l.b16 %v844
    %v884 = vunpack.c.l.b16 %v845
    %v885 = vpack.c.b16 %v870, %v869
    %v886 = vpack.c.b16 %v872, %v871
    %v887 = vpack.c.b16 %v874, %v873
    %v888 = vpack.c.b16 %v876, %v875
    %v889 = vpack.c.b16 %v878, %v877
    %v890 = vpack.c.b16 %v880, %v879
    %v891 = vpack.c.b16 %v882, %v881
    %v892 = vpack.c.b16 %v884, %v883
    %901 = vmatprep.subr.bf16.mxu0 0
    %902 = vmatpush1.bf16.msra.mxu0 %v885
    %903 = vmatprep.subr.bf16.mxu0 0
    %904 = vmatpush1.bf16.msra.mxu0 %v886
    %905 = vmatprep.subr.bf16.mxu0 0
    %906 = vmatpush1.bf16.msra.mxu0 %v887
    %907 = vmatprep.subr.bf16.mxu0 0
    %908 = vmatpush1.bf16.msra.mxu0 %v888
    %909 = vmatprep.subr.bf16.mxu0 0
    %910 = vmatpush1.bf16.msra.mxu0 %v889
    %911 = vmatprep.subr.bf16.mxu0 0
    %912 = vmatpush1.bf16.msra.mxu0 %v890
    %913 = vmatprep.subr.bf16.mxu0 0
    %914 = vmatpush1.bf16.msra.mxu0 %v891
    %915 = vmatprep.subr.bf16.mxu0 0
    %916 = vmatpush1.bf16.msra.mxu0 %v892
    %917 = vmatprep.subr.bf16.mxu0 0
    %918 = vmatpush1.bf16.msra.mxu0 0
    %919 = vmatprep.subr.bf16.mxu0 0
    %920 = vmatpush1.bf16.msra.mxu0 0
    %921 = vmatprep.subr.bf16.mxu0 0
    %922 = vmatpush1.bf16.msra.mxu0 0
    %923 = vmatprep.subr.bf16.mxu0 0
    %924 = vmatpush1.bf16.msra.mxu0 0
    %925 = vmatprep.subr.bf16.mxu0 0
    %926 = vmatpush1.bf16.msra.mxu0 0
    %927 = vmatprep.subr.bf16.mxu0 0
    %928 = vmatpush1.bf16.msra.mxu0 0
    %929 = vmatprep.subr.bf16.mxu0 0
    %930 = vmatpush1.bf16.msra.mxu0 0
    %931 = vmatprep.subr.bf16.mxu0 0
    %932 = vmatpush1.bf16.msra.mxu0 0
    %933 = vmatprep.mubr.bf16.mxu0 0
    %934 = vmatmul.mubr.bf16.gmra.mrb[0].mxu0 %v829
    %v935 = vpop.f32.mrb[0].mxu0
    %v936 = vadd.f32 %v851, %v935
    %v937 = vpop.f32.mrb[0].mxu0
    %v938 = vpop.f32.mrb[0].mxu0
    %v939 = vpop.f32.mrb[0].mxu0
    %940 = vdwg.mxu0
    %vm941 = vcmp.gt.f32.partialorder %v936, 0.0
    %v942 = vmul.f32 %v936, 1.442695
    %v943 = vpow.pop %v942
    %v944 = vsub.f32 %v943, 1.0
    %v945 = vmul.f32 %v944, 1.6732632
    %v946 = vsel %vm941, %v936, %v945
    %v947 = vmul.f32 %v946, 1.050701
    %v948 = vpack.c.bf16 %v947, %v947
    %v949 = vld [vmem:[#allocation10] sm:$0xf]
    %v950 = vld [vmem:[#allocation10 + $0x4] sm:$0xf]
    %v951 = vld [vmem:[#allocation10 + $0x8] sm:$0xf]
    %v952 = vld [vmem:[#allocation10 + $0xc] sm:$0xf]
    %v953 = vld [vmem:[#allocation10 + $0x10] sm:$0xf]
    %v954 = vld [vmem:[#allocation10 + $0x14] sm:$0xf]
    %v955 = vld [vmem:[#allocation10 + $0x18] sm:$0xf]
    %v956 = vld [vmem:[#allocation10 + $0x1c] sm:$0xf]
    %v957 = vld [vmem:[#allocation10 + $0x20] sm:$0xf]
    %v958 = vld [vmem:[#allocation10 + $0x24] sm:$0xf]
    %v959 = vld [vmem:[#allocation10 + $0x28] sm:$0xf]
    %v960 = vld [vmem:[#allocation10 + $0x2c] sm:$0xf]
    %v961 = vld [vmem:[#allocation10 + $0x30] sm:$0xf]
    %v962 = vld [vmem:[#allocation10 + $0x34] sm:$0xf]
    %v963 = vld [vmem:[#allocation10 + $0x38] sm:$0xf]
    %v964 = vld [vmem:[#allocation10 + $0x3c] sm:$0xf]
    %v965 = vld [vmem:[%s7] sm:$0x1]
    %v967 = vlaneseq
    %v968 = vshrl.u32 %v967, 7
    %v969 = vsub.s32 0, %v968
    %v970 = vrot.slane %v965, %v969
    %v988 = vunpack.c.l.b16 %v949
    %v989 = vunpack.c.l.b16 %v950
    %v990 = vunpack.c.l.b16 %v951
    %v991 = vunpack.c.l.b16 %v952
    %v992 = vunpack.c.l.b16 %v953
    %v993 = vunpack.c.l.b16 %v954
    %v994 = vunpack.c.l.b16 %v955
    %v995 = vunpack.c.l.b16 %v956
    %v996 = vunpack.c.l.b16 %v957
    %v997 = vunpack.c.l.b16 %v958
    %v998 = vunpack.c.l.b16 %v959
    %v999 = vunpack.c.l.b16 %v960
    %v1000 = vunpack.c.l.b16 %v961
    %v1001 = vunpack.c.l.b16 %v962
    %v1002 = vunpack.c.l.b16 %v963
    %v1003 = vunpack.c.l.b16 %v964
    %v1004 = vpack.c.b16 %v989, %v988
    %v1005 = vpack.c.b16 %v991, %v990
    %v1006 = vpack.c.b16 %v993, %v992
    %v1007 = vpack.c.b16 %v995, %v994
    %v1008 = vpack.c.b16 %v997, %v996
    %v1009 = vpack.c.b16 %v999, %v998
    %v1010 = vpack.c.b16 %v1001, %v1000
    %v1011 = vpack.c.b16 %v1003, %v1002
    %1020 = vmatprep.subr.bf16.mxu0 0
    %1021 = vmatpush1.bf16.msra.mxu0 %v1004
    %1022 = vmatprep.subr.bf16.mxu0 0
    %1023 = vmatpush1.bf16.msra.mxu0 %v1005
    %1024 = vmatprep.subr.bf16.mxu0 0
    %1025 = vmatpush1.bf16.msra.mxu0 %v1006
    %1026 = vmatprep.subr.bf16.mxu0 0
    %1027 = vmatpush1.bf16.msra.mxu0 %v1007
    %1028 = vmatprep.subr.bf16.mxu0 0
    %1029 = vmatpush1.bf16.msra.mxu0 %v1008
    %1030 = vmatprep.subr.bf16.mxu0 0
    %1031 = vmatpush1.bf16.msra.mxu0 %v1009
    %1032 = vmatprep.subr.bf16.mxu0 0
    %1033 = vmatpush1.bf16.msra.mxu0 %v1010
    %1034 = vmatprep.subr.bf16.mxu0 0
    %1035 = vmatpush1.bf16.msra.mxu0 %v1011
    %1036 = vmatprep.subr.bf16.mxu0 0
    %1037 = vmatpush1.bf16.msra.mxu0 0
    %1038 = vmatprep.subr.bf16.mxu0 0
    %1039 = vmatpush1.bf16.msra.mxu0 0
    %1040 = vmatprep.subr.bf16.mxu0 0
    %1041 = vmatpush1.bf16.msra.mxu0 0
    %1042 = vmatprep.subr.bf16.mxu0 0
    %1043 = vmatpush1.bf16.msra.mxu0 0
    %1044 = vmatprep.subr.bf16.mxu0 0
    %1045 = vmatpush1.bf16.msra.mxu0 0
    %1046 = vmatprep.subr.bf16.mxu0 0
    %1047 = vmatpush1.bf16.msra.mxu0 0
    %1048 = vmatprep.subr.bf16.mxu0 0
    %1049 = vmatpush1.bf16.msra.mxu0 0
    %1050 = vmatprep.subr.bf16.mxu0 0
    %1051 = vmatpush1.bf16.msra.mxu0 0
    %1052 = vmatprep.mubr.bf16.mxu0 0
    %1053 = vmatmul.mubr.bf16.gmra.mrb[0].mxu0 %v948
    %v1054 = vpop.f32.mrb[0].mxu0
    %v1055 = vadd.f32 %v970, %v1054
    %v1056 = vpop.f32.mrb[0].mxu0
    %v1057 = vpop.f32.mrb[0].mxu0
    %v1058 = vpop.f32.mrb[0].mxu0
    %1059 = vdwg.mxu0
    %vm1060 = vcmp.gt.f32.partialorder %v1055, 0.0
    %v1061 = vmul.f32 %v1055, 1.442695
    %v1062 = vpow.pop %v1061
    %v1063 = vsub.f32 %v1062, 1.0
    %v1064 = vmul.f32 %v1063, 1.6732632
    %v1065 = vsel %vm1060, %v1055, %v1064
    %v1066 = vmul.f32 %v1065, 1.050701
    %v1067 = vpack.c.bf16 %v1066, %v1066
    %v1068 = vld [vmem:[#allocation11] sm:$0xf]
    %v1069 = vld [vmem:[#allocation11 + $0x4] sm:$0xf]
    %v1070 = vld [vmem:[#allocation11 + $0x8] sm:$0xf]
    %v1071 = vld [vmem:[#allocation11 + $0xc] sm:$0xf]
    %v1072 = vld [vmem:[#allocation11 + $0x10] sm:$0xf]
    %v1073 = vld [vmem:[#allocation11 + $0x14] sm:$0xf]
    %v1074 = vld [vmem:[#allocation11 + $0x18] sm:$0xf]
    %v1075 = vld [vmem:[#allocation11 + $0x1c] sm:$0xf]
    %v1076 = vld [vmem:[#allocation11 + $0x20] sm:$0xf]
    %v1077 = vld [vmem:[#allocation11 + $0x24] sm:$0xf]
    %v1078 = vld [vmem:[#allocation11 + $0x28] sm:$0xf]
    %v1079 = vld [vmem:[#allocation11 + $0x2c] sm:$0xf]
    %v1080 = vld [vmem:[#allocation11 + $0x30] sm:$0xf]
    %v1081 = vld [vmem:[#allocation11 + $0x34] sm:$0xf]
    %v1082 = vld [vmem:[#allocation11 + $0x38] sm:$0xf]
    %v1083 = vld [vmem:[#allocation11 + $0x3c] sm:$0xf]
    %v1100 = vunpack.c.l.b16 %v1068
    %v1101 = vunpack.c.l.b16 %v1069
    %v1102 = vunpack.c.l.b16 %v1070
    %v1103 = vunpack.c.l.b16 %v1071
    %v1104 = vunpack.c.l.b16 %v1072
    %v1105 = vunpack.c.l.b16 %v1073
    %v1106 = vunpack.c.l.b16 %v1074
    %v1107 = vunpack.c.l.b16 %v1075
    %v1108 = vunpack.c.l.b16 %v1076
    %v1109 = vunpack.c.l.b16 %v1077
    %v1110 = vunpack.c.l.b16 %v1078
    %v1111 = vunpack.c.l.b16 %v1079
    %v1112 = vunpack.c.l.b16 %v1080
    %v1113 = vunpack.c.l.b16 %v1081
    %v1114 = vunpack.c.l.b16 %v1082
    %v1115 = vunpack.c.l.b16 %v1083
    %v1116 = vpack.c.b16 %v1101, %v1100
    %v1117 = vpack.c.b16 %v1103, %v1102
    %v1118 = vpack.c.b16 %v1105, %v1104
    %v1119 = vpack.c.b16 %v1107, %v1106
    %v1120 = vpack.c.b16 %v1109, %v1108
    %v1121 = vpack.c.b16 %v1111, %v1110
    %v1122 = vpack.c.b16 %v1113, %v1112
    %v1123 = vpack.c.b16 %v1115, %v1114
    %1132 = vmatprep.subr.bf16.mxu0 0
    %1133 = vmatpush1.bf16.msra.mxu0 %v1116
    %1134 = vmatprep.subr.bf16.mxu0 0
    %1135 = vmatpush1.bf16.msra.mxu0 %v1117
    %1136 = vmatprep.subr.bf16.mxu0 0
    %1137 = vmatpush1.bf16.msra.mxu0 %v1118
    %1138 = vmatprep.subr.bf16.mxu0 0
    %1139 = vmatpush1.bf16.msra.mxu0 %v1119
    %1140 = vmatprep.subr.bf16.mxu0 0
    %1141 = vmatpush1.bf16.msra.mxu0 %v1120
    %1142 = vmatprep.subr.bf16.mxu0 0
    %1143 = vmatpush1.bf16.msra.mxu0 %v1121
    %1144 = vmatprep.subr.bf16.mxu0 0
    %1145 = vmatpush1.bf16.msra.mxu0 %v1122
    %1146 = vmatprep.subr.bf16.mxu0 0
    %1147 = vmatpush1.bf16.msra.mxu0 %v1123
    %1148 = vmatprep.subr.bf16.mxu0 0
    %1149 = vmatpush1.bf16.msra.mxu0 0
    %1150 = vmatprep.subr.bf16.mxu0 0
    %1151 = vmatpush1.bf16.msra.mxu0 0
    %1152 = vmatprep.subr.bf16.mxu0 0
    %1153 = vmatpush1.bf16.msra.mxu0 0
    %1154 = vmatprep.subr.bf16.mxu0 0
    %1155 = vmatpush1.bf16.msra.mxu0 0
    %1156 = vmatprep.subr.bf16.mxu0 0
    %1157 = vmatpush1.bf16.msra.mxu0 0
    %1158 = vmatprep.subr.bf16.mxu0 0
    %1159 = vmatpush1.bf16.msra.mxu0 0
    %1160 = vmatprep.subr.bf16.mxu0 0
    %1161 = vmatpush1.bf16.msra.mxu0 0
    %1162 = vmatprep.subr.bf16.mxu0 0
    %1163 = vmatpush1.bf16.msra.mxu0 0
    %1164 = vmatprep.mubr.bf16.mxu0 0
    %1165 = vmatmul.mubr.bf16.gmra.mrb[0].mxu0 %v1067
    %v1166 = vpop.f32.mrb[0].mxu0
    %v1167 = vadd.f32 0.0, %v1166
    %v1168 = vpop.f32.mrb[0].mxu0
    %v1169 = vpop.f32.mrb[0].mxu0
    %v1170 = vpop.f32.mrb[0].mxu0
    %1171 = vdwg.mxu0
    %vm1172 = vcmp.gt.f32.partialorder %v1167, 0.0
    %v1173 = vmul.f32 %v1167, 1.442695
    %v1174 = vpow.pop %v1173
    %v1175 = vsub.f32 %v1174, 1.0
    %v1176 = vmul.f32 %v1175, 1.6732632
    %v1177 = vsel %vm1172, %v1167, %v1176
    %v1178 = vmul.f32 %v1177, 1.050701
    %v1179 = vpack.c.bf16 %v1178, %v1178
    %v1180 = vld [vmem:[#allocation13] sm:$0xf]
    %v1181 = vld [vmem:[#allocation13 + $0x4] sm:$0xf]
    %v1182 = vld [vmem:[#allocation13 + $0x8] sm:$0xf]
    %v1183 = vld [vmem:[#allocation13 + $0xc] sm:$0xf]
    %v1184 = vld [vmem:[#allocation13 + $0x10] sm:$0xf]
    %v1185 = vld [vmem:[#allocation13 + $0x14] sm:$0xf]
    %v1186 = vld [vmem:[#allocation13 + $0x18] sm:$0xf]
    %v1187 = vld [vmem:[#allocation13 + $0x1c] sm:$0xf]
    %v1188 = vld [vmem:[#allocation13 + $0x20] sm:$0xf]
    %v1189 = vld [vmem:[#allocation13 + $0x24] sm:$0xf]
    %v1190 = vld [vmem:[#allocation13 + $0x28] sm:$0xf]
    %v1191 = vld [vmem:[#allocation13 + $0x2c] sm:$0xf]
    %v1192 = vld [vmem:[#allocation13 + $0x30] sm:$0xf]
    %v1193 = vld [vmem:[#allocation13 + $0x34] sm:$0xf]
    %v1194 = vld [vmem:[#allocation13 + $0x38] sm:$0xf]
    %v1195 = vld [vmem:[#allocation13 + $0x3c] sm:$0xf]
    %v1196 = vld [vmem:[%s10] sm:$0x1]
    %v1198 = vlaneseq
    %v1199 = vshrl.u32 %v1198, 7
    %v1200 = vsub.s32 0, %v1199
    %v1201 = vrot.slane %v1196, %v1200
    %v1219 = vunpack.c.l.b16 %v1180
    %v1220 = vunpack.c.l.b16 %v1181
    %v1221 = vunpack.c.l.b16 %v1182
    %v1222 = vunpack.c.l.b16 %v1183
    %v1223 = vunpack.c.l.b16 %v1184
    %v1224 = vunpack.c.l.b16 %v1185
    %v1225 = vunpack.c.l.b16 %v1186
    %v1226 = vunpack.c.l.b16 %v1187
    %v1227 = vunpack.c.l.b16 %v1188
    %v1228 = vunpack.c.l.b16 %v1189
    %v1229 = vunpack.c.l.b16 %v1190
    %v1230 = vunpack.c.l.b16 %v1191
    %v1231 = vunpack.c.l.b16 %v1192
    %v1232 = vunpack.c.l.b16 %v1193
    %v1233 = vunpack.c.l.b16 %v1194
    %v1234 = vunpack.c.l.b16 %v1195
    %v1235 = vpack.c.b16 %v1220, %v1219
    %v1236 = vpack.c.b16 %v1222, %v1221
    %v1237 = vpack.c.b16 %v1224, %v1223
    %v1238 = vpack.c.b16 %v1226, %v1225
    %v1239 = vpack.c.b16 %v1228, %v1227
    %v1240 = vpack.c.b16 %v1230, %v1229
    %v1241 = vpack.c.b16 %v1232, %v1231
    %v1242 = vpack.c.b16 %v1234, %v1233
    %1251 = vmatprep.subr.bf16.mxu0 0
    %1252 = vmatpush1.bf16.msra.mxu0 %v1235
    %1253 = vmatprep.subr.bf16.mxu0 0
    %1254 = vmatpush1.bf16.msra.mxu0 %v1236
    %1255 = vmatprep.subr.bf16.mxu0 0
    %1256 = vmatpush1.bf16.msra.mxu0 %v1237
    %1257 = vmatprep.subr.bf16.mxu0 0
    %1258 = vmatpush1.bf16.msra.mxu0 %v1238
    %1259 = vmatprep.subr.bf16.mxu0 0
    %1260 = vmatpush1.bf16.msra.mxu0 %v1239
    %1261 = vmatprep.subr.bf16.mxu0 0
    %1262 = vmatpush1.bf16.msra.mxu0 %v1240
    %1263 = vmatprep.subr.bf16.mxu0 0
    %1264 = vmatpush1.bf16.msra.mxu0 %v1241
    %1265 = vmatprep.subr.bf16.mxu0 0
    %1266 = vmatpush1.bf16.msra.mxu0 %v1242
    %1267 = vmatprep.subr.bf16.mxu0 0
    %1268 = vmatpush1.bf16.msra.mxu0 0
    %1269 = vmatprep.subr.bf16.mxu0 0
    %1270 = vmatpush1.bf16.msra.mxu0 0
    %1271 = vmatprep.subr.bf16.mxu0 0
    %1272 = vmatpush1.bf16.msra.mxu0 0
    %1273 = vmatprep.subr.bf16.mxu0 0
    %1274 = vmatpush1.bf16.msra.mxu0 0
    %1275 = vmatprep.subr.bf16.mxu0 0
    %1276 = vmatpush1.bf16.msra.mxu0 0
    %1277 = vmatprep.subr.bf16.mxu0 0
    %1278 = vmatpush1.bf16.msra.mxu0 0
    %1279 = vmatprep.subr.bf16.mxu0 0
    %1280 = vmatpush1.bf16.msra.mxu0 0
    %1281 = vmatprep.subr.bf16.mxu0 0
    %1282 = vmatpush1.bf16.msra.mxu0 0
    %1283 = vmatprep.mubr.bf16.mxu0 0
    %1284 = vmatmul.mubr.bf16.gmra.mrb[0].mxu0 %v1179
    %v1285 = vpop.f32.mrb[0].mxu0
    %v1286 = vadd.f32 %v1201, %v1285
    %v1287 = vpop.f32.mrb[0].mxu0
    %v1288 = vpop.f32.mrb[0].mxu0
    %v1289 = vpop.f32.mrb[0].mxu0
    %1290 = vdwg.mxu0
    %v1291 = vlaneseq
    %v1292 = vand.u32 %v1291, 127
    %vm1293 = vcmp.lt.s32.totalorder %v1292, 10
    %v1294 = vsel %vm1293, %v1286, -inf
    %1295 = vmax.xlane.f32.xlu0 %v1294
    %v1296 = vpop.xlane.xlu0 %1295
    %v1297 = vsub.f32 %v1294, %v1296
    %v1298 = vmul.f32 %v1297, 1.442695
    %v1299 = vpow.pop %v1298
    %1300 = vadd.xlane.f32.xlu0 %v1299
    %v1301 = vpop.xlane.xlu0 %1300
    %v1302 = vlog2.pop %v1301
    %v1303 = vmul.f32 %v1302, 0.6931472
    %v1304 = vsub.f32 %v1297, %v1303
    %1305 = vst.msk [vmem:[#allocation14] sm:$0xff] %vm546, %v1304
    // Predicated region
    $region74: #{tpu_custom_call.1} parent=1 // pred_check
      _
    $region75: #{tpu_custom_call.1} parent=1 // pred_check_branch
      %1307 = sbr.rel (0) target = $region77
    $region76: #{tpu_custom_call.1} parent=1 // pred_region
      %s1309 = ssub.s32 128, 128
      %1310 = vsyncadd [#allocation4], %s1309
      %s1312 = sshll.u32 [#allocation14], 4
      %s1313 = int_to_ptr.vmem [resolvable:$true] %s1312
      %1315 = dma.vmem_to_hbm [thread:$0]  %s1313, 128, %s11, [#allocation4]
    $region77: #{tpu_custom_call.1} parent=1 // pred_fallthru
      _
    // Predicated region
    $region78: #{tpu_custom_call.1} parent=1 // pred_check
      _
    $region79: #{tpu_custom_call.1} parent=1 // pred_check_branch
      %1317 = sbr.rel (0) target = $region81
    $region80: #{tpu_custom_call.1} parent=1 // pred_region
      %1318 = dma.done [#allocation4], 128
    $region81: #{tpu_custom_call.1} parent=1 // pred_fallthru
      _
    %1319 = vsyncpa [#allocation3], 1
    %1320 = vsyncpa [#allocation6], 1
    %1321 = vsyncpa [#allocation9], 1
    %1322 = vsyncpa [#allocation12], 1
    %1323 = vsyncpa [#allocation4], 1

</llo_original>
